<compile_context>
chip_gen: v7x
topology: tpu7x:2x2x1
jax: 0.10.0
libtpu: 0.0.40
codegen_flags: <defaults>
</compile_context>

<pallas_src>
import functools

import jax
import jax.numpy as jnp
from jax.experimental import pallas as pl
from jax.experimental.pallas import tpu as pltpu


# ----------------------------------------------------------------------------
# Pallas kernel: per-sample [fold-dropout-into-w1 -> conv3x3 -> conv3x3]
# ----------------------------------------------------------------------------
def _decoder_kernel(xu_ref, e_ref, ds_ref, w1t_ref, b1_ref, w2t_ref, b2_ref,
                    o_ref, *, H, W):
    # xu_ref : (1, Cx, HW)       bf16  upsampled x, channel-major, HW on lanes
    # e_ref  : (1, Ce, HW)       bf16  skip tensor, channel-major
    # ds_ref : (1, 1, 9*Cin)     f32   dropout2d scales tiled per weight column
    # w1t_ref: (Cmid, 9*Cin)     f32   conv1 weight, transposed, [x taps | e taps]
    # b1_ref : (Cmid, 1)         f32
    # w2t_ref: (Cout, 9*Cmid)    bf16  conv2 weight, transposed
    # b2_ref : (Cout, 1)         f32
    # o_ref  : (1, Cout, HW)     f32   lane-dense output (HW on lanes)
    HW = H * W

    # W-boundary masks (y-boundaries are handled by the flat zero padding).
    xpos = jax.lax.broadcasted_iota(jnp.int32, (1, HW), 1) % W
    m_left = xpos >= 1          # reading column x-1 is valid
    m_right = xpos <= W - 2     # reading column x+1 is valid

    def im2col(a):
        # a: (C, HW) bf16 -> (9*C, HW) bf16; row order (ky, kx, c) matching
        # the HWIO -> (9*C, Co) weight reshape.  Each tap is a lane-shifted
        # copy of a once zero-padded flat row; slabs are stacked on sublanes.
        C = a.shape[0]
        ap = jnp.pad(a, ((0, 0), (W + 1, W + 1)))          # zero "SAME" pad
        slabs = []
        for ky in range(3):
            for kx in range(3):
                off = (W + 1) + (ky - 1) * W + (kx - 1)
                s = ap[:, off:off + HW]                     # (C, HW)
                if kx == 0:
                    s = jnp.where(m_left, s, jnp.zeros_like(s))
                elif kx == 2:
                    s = jnp.where(m_right, s, jnp.zeros_like(s))
                slabs.append(s)
        return jnp.concatenate(slabs, axis=0)               # sublane stack

    # conv1: single merged matmul (x taps stacked over e taps along K).
    cols1 = jnp.concatenate([im2col(xu_ref[0]), im2col(e_ref[0])], axis=0)
    # dropout2d folded into the conv1 weight columns (per-sample scale).
    w1s = (w1t_ref[...] * ds_ref[0]).astype(jnp.bfloat16)   # (Cmid, 9*Cin)
    h = jax.lax.dot_general(w1s, cols1, (((1,), (0,)), ((), ())),
                            preferred_element_type=jnp.float32)
    h = (h + b1_ref[...]).astype(jnp.bfloat16)               # (Cmid, HW)

    # conv2: also lane-dense (Cout, HW).
    cols2 = im2col(h)                                        # (9*Cmid, HW)
    y = jax.lax.dot_general(w2t_ref[...], cols2, (((1,), (0,)), ((), ())),
                            preferred_element_type=jnp.float32)
    # NOTE: output kept f32 for module fidelity; emit bf16 here if the next
    # block consumes bf16 (biggest relative win on v5e HBM writeback).
    o_ref[0] = (y + b2_ref[...]).astype(o_ref.dtype)


# ----------------------------------------------------------------------------
# JAX glue
# ----------------------------------------------------------------------------
def upsample_bilinear_2x_nchw(x):
    """x: NCHW f32 -> NCHW f32 with spatial dims doubled (align_corners=True)."""
    N, C, H, W = x.shape
    Ho, Wo = 2 * H, 2 * W

    def idx_w(n_in, n_out):
        if n_in == 1:
            z = jnp.zeros((n_out,), jnp.int32)
            return z, z, jnp.zeros((n_out,), jnp.float32)
        src = jnp.arange(n_out, dtype=jnp.float32) * (n_in - 1) / (n_out - 1)
        i0 = jnp.floor(src).astype(jnp.int32)
        i1 = jnp.minimum(i0 + 1, n_in - 1)
        return i0, i1, src - i0.astype(jnp.float32)

    h0, h1, wh = idx_w(H, Ho)
    w0, w1, ww = idx_w(W, Wo)
    xh = (x[:, :, h0, :] * (1.0 - wh)[None, None, :, None]
          + x[:, :, h1, :] * wh[None, None, :, None])
    out = (xh[:, :, :, w0] * (1.0 - ww)[None, None, None, :]
           + xh[:, :, :, w1] * ww[None, None, None, :])
    return out


@jax.jit
def decoder_block_forward(x_nchw, e_nchw, w1, b1, w2, b2, drop_scale):
    """DecoderBlock.forward.

    x_nchw: (N, Cx, H, W); e_nchw: (N, Ce, 2H, 2W); w1/w2: HWIO; b1/b2: (C,);
    drop_scale: (N, Cx+Ce) per-(sample, channel) dropout2d keep-mask / (1-p).
    Returns NCHW output (N, Cout, 2H, 2W) in f32.
    """
    if e_nchw is None:
        # TODO(synk): e=None (no skip connection) path is not specialized here.
        raise NotImplementedError("skip tensor e is always provided here")

    N, Cx = x_nchw.shape[0], x_nchw.shape[1]
    Ce = e_nchw.shape[1]
    Cin = Cx + Ce
    Cmid = w1.shape[-1]
    Cout = w2.shape[-1]

    # f32 bilinear upsample stays in XLA (static gather); NCHW is already
    # channel-major, so the kernel layout is a free reshape + bf16 cast.
    x_up = upsample_bilinear_2x_nchw(x_nchw.astype(jnp.float32))
    _, _, H2, W2 = x_up.shape
    HW = H2 * W2
    xu = x_up.reshape(N, Cx, HW).astype(jnp.bfloat16)
    ef = e_nchw.astype(jnp.float32).reshape(N, Ce, HW).astype(jnp.bfloat16)

    # Kernel-friendly parameter layouts (tiny one-time reshapes in XLA).
    w1x = w1[:, :, :Cx, :].reshape(9 * Cx, Cmid)
    w1e = w1[:, :, Cx:, :].reshape(9 * Ce, Cmid)
    w1t = jnp.concatenate([w1x, w1e], axis=0).T.astype(jnp.float32)  # (Cmid,9Cin)
    w2t = w2.reshape(9 * Cmid, Cout).T.astype(jnp.bfloat16)          # (Cout,9Cmid)
    b1c = b1.reshape(Cmid, 1).astype(jnp.float32)
    b2c = b2.reshape(Cout, 1).astype(jnp.float32)
    # Dropout scales tiled to match the w1t column order: 9 x-taps, 9 e-taps.
    ds = jnp.concatenate([jnp.tile(drop_scale[:, :Cx], (1, 9)),
                          jnp.tile(drop_scale[:, Cx:], (1, 9))], axis=1)
    ds = ds.reshape(N, 1, 9 * Cin).astype(jnp.float32)

    flops = 2 * N * HW * 9 * (Cin * Cmid + Cmid * Cout)
    bytes_accessed = ((xu.size + ef.size + w2t.size) * 2
                      + (N * Cout * HW + w1t.size) * 4
                      + (b1c.size + b2c.size + ds.size) * 4)

    kernel = functools.partial(_decoder_kernel, H=H2, W=W2)

    out = pl.pallas_call(
        kernel,
        out_shape=jax.ShapeDtypeStruct((N, Cout, HW), jnp.float32),
        grid_spec=pltpu.PrefetchScalarGridSpec(
            num_scalar_prefetch=0,
            grid=(N,),
            in_specs=[
                pl.BlockSpec((1, Cx, HW), lambda n: (n, 0, 0)),
                pl.BlockSpec((1, Ce, HW), lambda n: (n, 0, 0)),
                pl.BlockSpec((1, 1, 9 * Cin), lambda n: (n, 0, 0)),
                # grid-invariant parameters (constant index_map -> no re-DMA).
                pl.BlockSpec((Cmid, 9 * Cin), lambda n: (0, 0)),
                pl.BlockSpec((Cmid, 1), lambda n: (0, 0)),
                pl.BlockSpec((Cout, 9 * Cmid), lambda n: (0, 0)),
                pl.BlockSpec((Cout, 1), lambda n: (0, 0)),
            ],
            out_specs=pl.BlockSpec((1, Cout, HW), lambda n: (n, 0, 0)),
        ),
        compiler_params=pltpu.CompilerParams(
            dimension_semantics=("parallel",),
            vmem_limit_bytes=48 * 1024 * 1024),
        cost_estimate=pl.CostEstimate(
            flops=flops, transcendentals=0, bytes_accessed=bytes_accessed),
    )(xu, ef, ds, w1t, b1c, w2t, b2c)

    # (N, Cout, H2*W2) is already channel-major: NCHW is a free reshape.
    return out.reshape(N, Cout, H2, W2)


# ----------------------------------------------------------------------------
# Pure-JAX reference (mirrors the kernel's bf16 quantization points exactly)
# ----------------------------------------------------------------------------
def reference_forward(x_nchw, e_nchw, w1, b1, w2, b2, drop_scale):
    x_up = upsample_bilinear_2x_nchw(x_nchw.astype(jnp.float32))
    cat = jnp.concatenate([x_up, e_nchw.astype(jnp.float32)],
                          axis=1).astype(jnp.bfloat16)
    dn = ('NCHW', 'HWIO', 'NCHW')
    w2b = w2.astype(jnp.bfloat16)

    def one(c, ds):
        # Dropout folded into conv1's weight (same rounding point as kernel).
        w1s = (w1 * ds[None, None, :, None]).astype(jnp.bfloat16)
        h = jax.lax.conv_general_dilated(
            c[None], w1s, (1, 1), 'SAME', dimension_numbers=dn,
            preferred_element_type=jnp.float32) + b1.reshape(1, -1, 1, 1)
        h = h.astype(jnp.bfloat16)
        y = jax.lax.conv_general_dilated(
            h, w2b, (1, 1), 'SAME', dimension_numbers=dn,
            preferred_element_type=jnp.float32) + b2.reshape(1, -1, 1, 1)
        return y[0]

    return jax.vmap(one)(cat, drop_scale)


# ----------------------------------------------------------------------------
# Main
# ----------------------------------------------------------------------------
if __name__ == "__main__":
    key = jax.random.PRNGKey(0)
    kx, ke, kw1, kb1, kw2, kb2, kd = jax.random.split(key, 7)

    # Small, self-consistent shapes: x upsampled 2x then concatenated with e.
    N, Cx, H, W = 2, 4, 16, 16
    Ce = 4
    in_channels = Cx + Ce        # 8
    channels = 8                 # mid
    out_channels = 4
    p_drop = 0.1

    x = jax.random.normal(kx, (N, Cx, H, W), jnp.float32)
    e = jax.random.normal(ke, (N, Ce, 2 * H, 2 * W), jnp.float32)

    # conv3x3 = Conv2d(k=3, pad=1, bias=True); weights stored HWIO.
    w1 = jax.random.normal(kw1, (3, 3, in_channels, channels), jnp.float32) * 0.1
    b1 = jax.random.normal(kb1, (channels,), jnp.float32) * 0.1
    w2 = jax.random.normal(kw2, (3, 3, channels, out_channels), jnp.float32) * 0.1
    b2 = jax.random.normal(kb2, (out_channels,), jnp.float32) * 0.1

    # F.dropout2d (training mode): per-(sample, channel) keep mask / (1-p).
    # TODO(synk): torch's RNG stream is not reproduced; mask uses JAX's PRNG.
    keep = jax.random.bernoulli(kd, 1.0 - p_drop, (N, in_channels))
    drop_scale = keep.astype(jnp.float32) / (1.0 - p_drop)

    out = jax.block_until_ready(
        decoder_block_forward(x, e, w1, b1, w2, b2, drop_scale))
    ref = reference_forward(x, e, w1, b1, w2, b2, drop_scale)

    assert out.shape == (N, out_channels, 2 * H, 2 * W), out.shape
    err = float(jnp.max(jnp.abs(out - ref)))
    assert err < 1e-2, err
    print("KERNEL_OK")
</pallas_src>

<mosaic_0001>
module attributes {stable_mosaic.version = 11 : i64} {
  func.func @_decoder_kernel(%arg0: i32, %arg1: memref<1x4x1024xbf16, #tpu.memory_space<vmem>>, %arg2: memref<1x4x1024xbf16, #tpu.memory_space<vmem>>, %arg3: memref<1x1x72xf32, #tpu.memory_space<vmem>>, %arg4: memref<8x72xf32, #tpu.memory_space<vmem>>, %arg5: memref<8x1xf32, #tpu.memory_space<vmem>>, %arg6: memref<4x72xbf16, #tpu.memory_space<vmem>>, %arg7: memref<4x1xf32, #tpu.memory_space<vmem>>, %arg8: memref<1x4x1024xf32, #tpu.memory_space<vmem>>) attributes {dimension_semantics = [#tpu.dimension_semantics<parallel>], iteration_bounds = array<i64: 2>, scalar_prefetch = 0 : i64, scratch_operands = 0 : i64, tpu.core_type = #tpu.core_type<tc>, window_params = [{transform_indices = @transform_0, window_bounds = array<i64: 1, 4, 1024>}, {transform_indices = @transform_1, window_bounds = array<i64: 1, 4, 1024>}, {transform_indices = @transform_2, window_bounds = array<i64: 1, 1, 72>}, {pipeline_mode = #tpu.pipeline_mode<synchronous>, transform_indices = @transform_3, window_bounds = array<i64: 8, 72>}, {pipeline_mode = #tpu.pipeline_mode<synchronous>, transform_indices = @transform_4, window_bounds = array<i64: 8, 1>}, {pipeline_mode = #tpu.pipeline_mode<synchronous>, transform_indices = @transform_5, window_bounds = array<i64: 4, 72>}, {pipeline_mode = #tpu.pipeline_mode<synchronous>, transform_indices = @transform_6, window_bounds = array<i64: 4, 1>}, {transform_indices = @transform_7, window_bounds = array<i64: 1, 4, 1024>}]} {
    %0 = tpu.iota {dimensions = array<i32: 1>} : vector<1x1024xi32>
    %c32_i32 = arith.constant 32 : i32
    %c0_i32 = arith.constant 0 : i32
    %1 = arith.cmpi eq, %c32_i32, %c0_i32 : i32
    %c1_i32 = arith.constant 1 : i32
    %2 = arith.select %1, %c1_i32, %c32_i32 : i32
    %3 = vector.broadcast %2 : i32 to vector<1x1024xi32>
    %4 = arith.remsi %0, %3 : vector<1x1024xi32>
    %c0_i32_0 = arith.constant 0 : i32
    %5 = vector.broadcast %c0_i32_0 : i32 to vector<1x1024xi32>
    %6 = arith.cmpi ne, %4, %5 : vector<1x1024xi32>
    %c0_i32_1 = arith.constant 0 : i32
    %7 = vector.broadcast %c0_i32_1 : i32 to vector<1x1024xi32>
    %8 = arith.cmpi slt, %4, %7 : vector<1x1024xi32>
    %c0_i32_2 = arith.constant 0 : i32
    %9 = arith.cmpi slt, %2, %c0_i32_2 : i32
    %10 = vector.broadcast %9 : i1 to vector<1x1024xi1>
    %11 = vector.broadcast %10 : vector<1x1024xi1> to vector<1x1024xi1>
    %12 = arith.xori %8, %11 : vector<1x1024xi1>
    %13 = arith.andi %12, %6 : vector<1x1024xi1>
    %14 = vector.broadcast %2 : i32 to vector<1x1024xi32>
    %15 = arith.addi %4, %14 : vector<1x1024xi32>
    %16 = arith.select %13, %15, %4 : vector<1x1024xi1>, vector<1x1024xi32>
    %c1_i32_3 = arith.constant 1 : i32
    %17 = vector.broadcast %c1_i32_3 : i32 to vector<1x1024xi32>
    %18 = arith.cmpi sge, %16, %17 : vector<1x1024xi32>
    %c30_i32 = arith.constant 30 : i32
    %19 = vector.broadcast %c30_i32 : i32 to vector<1x1024xi32>
    %20 = arith.cmpi sle, %16, %19 : vector<1x1024xi32>
    %c0 = arith.constant 0 : index
    %c0_4 = arith.constant 0 : index
    %c0_5 = arith.constant 0 : index
    %21 = vector.load %arg1[%c0, %c0_4, %c0_5] : memref<1x4x1024xbf16, #tpu.memory_space<vmem>>, vector<1x4x1024xbf16>
    %22 = vector.shape_cast %21 : vector<1x4x1024xbf16> to vector<4x1024xbf16>
    %c0_i32_6 = arith.constant 0 : i32
    %23 = arith.sitofp %c0_i32_6 : i32 to bf16
    %24 = vector.broadcast %23 : bf16 to vector<4x33xbf16>
    %25 = tpu.concatenate %24, %22 in 1 : vector<4x33xbf16>, vector<4x1024xbf16> -> vector<4x1057xbf16>
    %26 = vector.broadcast %23 : bf16 to vector<4x33xbf16>
    %27 = tpu.concatenate %25, %26 in 1 : vector<4x1057xbf16>, vector<4x33xbf16> -> vector<4x1090xbf16>
    %28 = vector.extract_strided_slice %27 {offsets = [0, 0], sizes = [4, 1024], strides = [1, 1]} : vector<4x1090xbf16> to vector<4x1024xbf16>
    %cst = arith.constant 0.000000e+00 : bf16
    %29 = vector.broadcast %cst : bf16 to vector<4x1024xbf16>
    %30 = vector.shape_cast %18 : vector<1x1024xi1> to vector<1x1024xi1>
    %31 = vector.broadcast %30 : vector<1x1024xi1> to vector<4x1024xi1>
    %32 = arith.select %31, %28, %29 : vector<4x1024xi1>, vector<4x1024xbf16>
    %33 = vector.extract_strided_slice %27 {offsets = [0, 1], sizes = [4, 1024], strides = [1, 1]} : vector<4x1090xbf16> to vector<4x1024xbf16>
    %34 = vector.extract_strided_slice %27 {offsets = [0, 2], sizes = [4, 1024], strides = [1, 1]} : vector<4x1090xbf16> to vector<4x1024xbf16>
    %cst_7 = arith.constant 0.000000e+00 : bf16
    %35 = vector.broadcast %cst_7 : bf16 to vector<4x1024xbf16>
    %36 = vector.shape_cast %20 : vector<1x1024xi1> to vector<1x1024xi1>
    %37 = vector.broadcast %36 : vector<1x1024xi1> to vector<4x1024xi1>
    %38 = arith.select %37, %34, %35 : vector<4x1024xi1>, vector<4x1024xbf16>
    %39 = vector.extract_strided_slice %27 {offsets = [0, 32], sizes = [4, 1024], strides = [1, 1]} : vector<4x1090xbf16> to vector<4x1024xbf16>
    %cst_8 = arith.constant 0.000000e+00 : bf16
    %40 = vector.broadcast %cst_8 : bf16 to vector<4x1024xbf16>
    %41 = vector.shape_cast %18 : vector<1x1024xi1> to vector<1x1024xi1>
    %42 = vector.broadcast %41 : vector<1x1024xi1> to vector<4x1024xi1>
    %43 = arith.select %42, %39, %40 : vector<4x1024xi1>, vector<4x1024xbf16>
    %44 = vector.extract_strided_slice %27 {offsets = [0, 33], sizes = [4, 1024], strides = [1, 1]} : vector<4x1090xbf16> to vector<4x1024xbf16>
    %45 = vector.extract_strided_slice %27 {offsets = [0, 34], sizes = [4, 1024], strides = [1, 1]} : vector<4x1090xbf16> to vector<4x1024xbf16>
    %cst_9 = arith.constant 0.000000e+00 : bf16
    %46 = vector.broadcast %cst_9 : bf16 to vector<4x1024xbf16>
    %47 = vector.shape_cast %20 : vector<1x1024xi1> to vector<1x1024xi1>
    %48 = vector.broadcast %47 : vector<1x1024xi1> to vector<4x1024xi1>
    %49 = arith.select %48, %45, %46 : vector<4x1024xi1>, vector<4x1024xbf16>
    %50 = vector.extract_strided_slice %27 {offsets = [0, 64], sizes = [4, 1024], strides = [1, 1]} : vector<4x1090xbf16> to vector<4x1024xbf16>
    %cst_10 = arith.constant 0.000000e+00 : bf16
    %51 = vector.broadcast %cst_10 : bf16 to vector<4x1024xbf16>
    %52 = vector.shape_cast %18 : vector<1x1024xi1> to vector<1x1024xi1>
    %53 = vector.broadcast %52 : vector<1x1024xi1> to vector<4x1024xi1>
    %54 = arith.select %53, %50, %51 : vector<4x1024xi1>, vector<4x1024xbf16>
    %55 = vector.extract_strided_slice %27 {offsets = [0, 65], sizes = [4, 1024], strides = [1, 1]} : vector<4x1090xbf16> to vector<4x1024xbf16>
    %56 = vector.extract_strided_slice %27 {offsets = [0, 66], sizes = [4, 1024], strides = [1, 1]} : vector<4x1090xbf16> to vector<4x1024xbf16>
    %cst_11 = arith.constant 0.000000e+00 : bf16
    %57 = vector.broadcast %cst_11 : bf16 to vector<4x1024xbf16>
    %58 = vector.shape_cast %20 : vector<1x1024xi1> to vector<1x1024xi1>
    %59 = vector.broadcast %58 : vector<1x1024xi1> to vector<4x1024xi1>
    %60 = arith.select %59, %56, %57 : vector<4x1024xi1>, vector<4x1024xbf16>
    %61 = tpu.concatenate %32, %33, %38, %43, %44, %49, %54, %55, %60 in 0 : vector<4x1024xbf16>, vector<4x1024xbf16>, vector<4x1024xbf16>, vector<4x1024xbf16>, vector<4x1024xbf16>, vector<4x1024xbf16>, vector<4x1024xbf16>, vector<4x1024xbf16>, vector<4x1024xbf16> -> vector<36x1024xbf16>
    %c0_12 = arith.constant 0 : index
    %c0_13 = arith.constant 0 : index
    %c0_14 = arith.constant 0 : index
    %62 = vector.load %arg2[%c0_12, %c0_13, %c0_14] : memref<1x4x1024xbf16, #tpu.memory_space<vmem>>, vector<1x4x1024xbf16>
    %63 = vector.shape_cast %62 : vector<1x4x1024xbf16> to vector<4x1024xbf16>
    %c0_i32_15 = arith.constant 0 : i32
    %64 = arith.sitofp %c0_i32_15 : i32 to bf16
    %65 = vector.broadcast %64 : bf16 to vector<4x33xbf16>
    %66 = tpu.concatenate %65, %63 in 1 : vector<4x33xbf16>, vector<4x1024xbf16> -> vector<4x1057xbf16>
    %67 = vector.broadcast %64 : bf16 to vector<4x33xbf16>
    %68 = tpu.concatenate %66, %67 in 1 : vector<4x1057xbf16>, vector<4x33xbf16> -> vector<4x1090xbf16>
    %69 = vector.extract_strided_slice %68 {offsets = [0, 0], sizes = [4, 1024], strides = [1, 1]} : vector<4x1090xbf16> to vector<4x1024xbf16>
    %cst_16 = arith.constant 0.000000e+00 : bf16
    %70 = vector.broadcast %cst_16 : bf16 to vector<4x1024xbf16>
    %71 = vector.shape_cast %18 : vector<1x1024xi1> to vector<1x1024xi1>
    %72 = vector.broadcast %71 : vector<1x1024xi1> to vector<4x1024xi1>
    %73 = arith.select %72, %69, %70 : vector<4x1024xi1>, vector<4x1024xbf16>
    %74 = vector.extract_strided_slice %68 {offsets = [0, 1], sizes = [4, 1024], strides = [1, 1]} : vector<4x1090xbf16> to vector<4x1024xbf16>
    %75 = vector.extract_strided_slice %68 {offsets = [0, 2], sizes = [4, 1024], strides = [1, 1]} : vector<4x1090xbf16> to vector<4x1024xbf16>
    %cst_17 = arith.constant 0.000000e+00 : bf16
    %76 = vector.broadcast %cst_17 : bf16 to vector<4x1024xbf16>
    %77 = vector.shape_cast %20 : vector<1x1024xi1> to vector<1x1024xi1>
    %78 = vector.broadcast %77 : vector<1x1024xi1> to vector<4x1024xi1>
    %79 = arith.select %78, %75, %76 : vector<4x1024xi1>, vector<4x1024xbf16>
    %80 = vector.extract_strided_slice %68 {offsets = [0, 32], sizes = [4, 1024], strides = [1, 1]} : vector<4x1090xbf16> to vector<4x1024xbf16>
    %cst_18 = arith.constant 0.000000e+00 : bf16
    %81 = vector.broadcast %cst_18 : bf16 to vector<4x1024xbf16>
    %82 = vector.shape_cast %18 : vector<1x1024xi1> to vector<1x1024xi1>
    %83 = vector.broadcast %82 : vector<1x1024xi1> to vector<4x1024xi1>
    %84 = arith.select %83, %80, %81 : vector<4x1024xi1>, vector<4x1024xbf16>
    %85 = vector.extract_strided_slice %68 {offsets = [0, 33], sizes = [4, 1024], strides = [1, 1]} : vector<4x1090xbf16> to vector<4x1024xbf16>
    %86 = vector.extract_strided_slice %68 {offsets = [0, 34], sizes = [4, 1024], strides = [1, 1]} : vector<4x1090xbf16> to vector<4x1024xbf16>
    %cst_19 = arith.constant 0.000000e+00 : bf16
    %87 = vector.broadcast %cst_19 : bf16 to vector<4x1024xbf16>
    %88 = vector.shape_cast %20 : vector<1x1024xi1> to vector<1x1024xi1>
    %89 = vector.broadcast %88 : vector<1x1024xi1> to vector<4x1024xi1>
    %90 = arith.select %89, %86, %87 : vector<4x1024xi1>, vector<4x1024xbf16>
    %91 = vector.extract_strided_slice %68 {offsets = [0, 64], sizes = [4, 1024], strides = [1, 1]} : vector<4x1090xbf16> to vector<4x1024xbf16>
    %cst_20 = arith.constant 0.000000e+00 : bf16
    %92 = vector.broadcast %cst_20 : bf16 to vector<4x1024xbf16>
    %93 = vector.shape_cast %18 : vector<1x1024xi1> to vector<1x1024xi1>
    %94 = vector.broadcast %93 : vector<1x1024xi1> to vector<4x1024xi1>
    %95 = arith.select %94, %91, %92 : vector<4x1024xi1>, vector<4x1024xbf16>
    %96 = vector.extract_strided_slice %68 {offsets = [0, 65], sizes = [4, 1024], strides = [1, 1]} : vector<4x1090xbf16> to vector<4x1024xbf16>
    %97 = vector.extract_strided_slice %68 {offsets = [0, 66], sizes = [4, 1024], strides = [1, 1]} : vector<4x1090xbf16> to vector<4x1024xbf16>
    %cst_21 = arith.constant 0.000000e+00 : bf16
    %98 = vector.broadcast %cst_21 : bf16 to vector<4x1024xbf16>
    %99 = vector.shape_cast %20 : vector<1x1024xi1> to vector<1x1024xi1>
    %100 = vector.broadcast %99 : vector<1x1024xi1> to vector<4x1024xi1>
    %101 = arith.select %100, %97, %98 : vector<4x1024xi1>, vector<4x1024xbf16>
    %102 = tpu.concatenate %73, %74, %79, %84, %85, %90, %95, %96, %101 in 0 : vector<4x1024xbf16>, vector<4x1024xbf16>, vector<4x1024xbf16>, vector<4x1024xbf16>, vector<4x1024xbf16>, vector<4x1024xbf16>, vector<4x1024xbf16>, vector<4x1024xbf16>, vector<4x1024xbf16> -> vector<36x1024xbf16>
    %103 = tpu.concatenate %61, %102 in 0 : vector<36x1024xbf16>, vector<36x1024xbf16> -> vector<72x1024xbf16>
    %c0_22 = arith.constant 0 : index
    %c0_23 = arith.constant 0 : index
    %104 = vector.load %arg4[%c0_22, %c0_23] : memref<8x72xf32, #tpu.memory_space<vmem>>, vector<8x72xf32>
    %c0_24 = arith.constant 0 : index
    %c0_25 = arith.constant 0 : index
    %c0_26 = arith.constant 0 : index
    %105 = vector.load %arg3[%c0_24, %c0_25, %c0_26] : memref<1x1x72xf32, #tpu.memory_space<vmem>>, vector<1x1x72xf32>
    %106 = vector.shape_cast %105 : vector<1x1x72xf32> to vector<1x72xf32>
    %107 = vector.broadcast %106 : vector<1x72xf32> to vector<8x72xf32>
    %108 = arith.mulf %104, %107 : vector<8x72xf32>
    %109 = arith.truncf %108 : vector<8x72xf32> to vector<8x72xbf16>
    %cst_27 = arith.constant dense<0.000000e+00> : vector<8x1024xf32>
    %110 = tpu.matmul %109, %103, %cst_27 {dimension_numbers = #tpu.dot_dimension_numbers<[1], [0], [0], [1], [0, 0, 1, 1], [], []>} : vector<8x72xbf16>, vector<72x1024xbf16>, vector<8x1024xf32> -> vector<8x1024xf32>
    %c0_28 = arith.constant 0 : index
    %c0_29 = arith.constant 0 : index
    %111 = vector.load %arg5[%c0_28, %c0_29] : memref<8x1xf32, #tpu.memory_space<vmem>>, vector<8x1xf32>
    %112 = vector.broadcast %111 : vector<8x1xf32> to vector<8x1024xf32>
    %113 = arith.addf %110, %112 : vector<8x1024xf32>
    %114 = arith.truncf %113 : vector<8x1024xf32> to vector<8x1024xbf16>
    %c0_i32_30 = arith.constant 0 : i32
    %115 = arith.sitofp %c0_i32_30 : i32 to bf16
    %116 = vector.broadcast %115 : bf16 to vector<8x33xbf16>
    %117 = tpu.concatenate %116, %114 in 1 : vector<8x33xbf16>, vector<8x1024xbf16> -> vector<8x1057xbf16>
    %118 = vector.broadcast %115 : bf16 to vector<8x33xbf16>
    %119 = tpu.concatenate %117, %118 in 1 : vector<8x1057xbf16>, vector<8x33xbf16> -> vector<8x1090xbf16>
    %120 = vector.extract_strided_slice %119 {offsets = [0, 0], sizes = [8, 1024], strides = [1, 1]} : vector<8x1090xbf16> to vector<8x1024xbf16>
    %cst_31 = arith.constant 0.000000e+00 : bf16
    %121 = vector.broadcast %cst_31 : bf16 to vector<8x1024xbf16>
    %122 = vector.shape_cast %18 : vector<1x1024xi1> to vector<1x1024xi1>
    %123 = vector.broadcast %122 : vector<1x1024xi1> to vector<8x1024xi1>
    %124 = arith.select %123, %120, %121 : vector<8x1024xi1>, vector<8x1024xbf16>
    %125 = vector.extract_strided_slice %119 {offsets = [0, 1], sizes = [8, 1024], strides = [1, 1]} : vector<8x1090xbf16> to vector<8x1024xbf16>
    %126 = vector.extract_strided_slice %119 {offsets = [0, 2], sizes = [8, 1024], strides = [1, 1]} : vector<8x1090xbf16> to vector<8x1024xbf16>
    %cst_32 = arith.constant 0.000000e+00 : bf16
    %127 = vector.broadcast %cst_32 : bf16 to vector<8x1024xbf16>
    %128 = vector.shape_cast %20 : vector<1x1024xi1> to vector<1x1024xi1>
    %129 = vector.broadcast %128 : vector<1x1024xi1> to vector<8x1024xi1>
    %130 = arith.select %129, %126, %127 : vector<8x1024xi1>, vector<8x1024xbf16>
    %131 = vector.extract_strided_slice %119 {offsets = [0, 32], sizes = [8, 1024], strides = [1, 1]} : vector<8x1090xbf16> to vector<8x1024xbf16>
    %cst_33 = arith.constant 0.000000e+00 : bf16
    %132 = vector.broadcast %cst_33 : bf16 to vector<8x1024xbf16>
    %133 = vector.shape_cast %18 : vector<1x1024xi1> to vector<1x1024xi1>
    %134 = vector.broadcast %133 : vector<1x1024xi1> to vector<8x1024xi1>
    %135 = arith.select %134, %131, %132 : vector<8x1024xi1>, vector<8x1024xbf16>
    %136 = vector.extract_strided_slice %119 {offsets = [0, 33], sizes = [8, 1024], strides = [1, 1]} : vector<8x1090xbf16> to vector<8x1024xbf16>
    %137 = vector.extract_strided_slice %119 {offsets = [0, 34], sizes = [8, 1024], strides = [1, 1]} : vector<8x1090xbf16> to vector<8x1024xbf16>
    %cst_34 = arith.constant 0.000000e+00 : bf16
    %138 = vector.broadcast %cst_34 : bf16 to vector<8x1024xbf16>
    %139 = vector.shape_cast %20 : vector<1x1024xi1> to vector<1x1024xi1>
    %140 = vector.broadcast %139 : vector<1x1024xi1> to vector<8x1024xi1>
    %141 = arith.select %140, %137, %138 : vector<8x1024xi1>, vector<8x1024xbf16>
    %142 = vector.extract_strided_slice %119 {offsets = [0, 64], sizes = [8, 1024], strides = [1, 1]} : vector<8x1090xbf16> to vector<8x1024xbf16>
    %cst_35 = arith.constant 0.000000e+00 : bf16
    %143 = vector.broadcast %cst_35 : bf16 to vector<8x1024xbf16>
    %144 = vector.shape_cast %18 : vector<1x1024xi1> to vector<1x1024xi1>
    %145 = vector.broadcast %144 : vector<1x1024xi1> to vector<8x1024xi1>
    %146 = arith.select %145, %142, %143 : vector<8x1024xi1>, vector<8x1024xbf16>
    %147 = vector.extract_strided_slice %119 {offsets = [0, 65], sizes = [8, 1024], strides = [1, 1]} : vector<8x1090xbf16> to vector<8x1024xbf16>
    %148 = vector.extract_strided_slice %119 {offsets = [0, 66], sizes = [8, 1024], strides = [1, 1]} : vector<8x1090xbf16> to vector<8x1024xbf16>
    %cst_36 = arith.constant 0.000000e+00 : bf16
    %149 = vector.broadcast %cst_36 : bf16 to vector<8x1024xbf16>
    %150 = vector.shape_cast %20 : vector<1x1024xi1> to vector<1x1024xi1>
    %151 = vector.broadcast %150 : vector<1x1024xi1> to vector<8x1024xi1>
    %152 = arith.select %151, %148, %149 : vector<8x1024xi1>, vector<8x1024xbf16>
    %153 = tpu.concatenate %124, %125, %130, %135, %136, %141, %146, %147, %152 in 0 : vector<8x1024xbf16>, vector<8x1024xbf16>, vector<8x1024xbf16>, vector<8x1024xbf16>, vector<8x1024xbf16>, vector<8x1024xbf16>, vector<8x1024xbf16>, vector<8x1024xbf16>, vector<8x1024xbf16> -> vector<72x1024xbf16>
    %c0_37 = arith.constant 0 : index
    %c0_38 = arith.constant 0 : index
    %154 = vector.load %arg6[%c0_37, %c0_38] : memref<4x72xbf16, #tpu.memory_space<vmem>>, vector<4x72xbf16>
    %cst_39 = arith.constant dense<0.000000e+00> : vector<4x1024xf32>
    %155 = tpu.matmul %154, %153, %cst_39 {dimension_numbers = #tpu.dot_dimension_numbers<[1], [0], [0], [1], [0, 0, 1, 1], [], []>} : vector<4x72xbf16>, vector<72x1024xbf16>, vector<4x1024xf32> -> vector<4x1024xf32>
    %c0_40 = arith.constant 0 : index
    %c0_41 = arith.constant 0 : index
    %156 = vector.load %arg7[%c0_40, %c0_41] : memref<4x1xf32, #tpu.memory_space<vmem>>, vector<4x1xf32>
    %157 = vector.broadcast %156 : vector<4x1xf32> to vector<4x1024xf32>
    %158 = arith.addf %155, %157 : vector<4x1024xf32>
    %c0_42 = arith.constant 0 : index
    %c0_43 = arith.constant 0 : index
    %c0_44 = arith.constant 0 : index
    %159 = vector.load %arg8[%c0_42, %c0_43, %c0_44] : memref<1x4x1024xf32, #tpu.memory_space<vmem>>, vector<1x4x1024xf32>
    %160 = vector.shape_cast %159 : vector<1x4x1024xf32> to vector<4x1024xf32>
    %161 = vector.shape_cast %158 : vector<4x1024xf32> to vector<1x4x1024xf32>
    tpu.vector_store %arg8[%c0_42, %c0_43, %c0_44], %161 {strides = array<i32>} : memref<1x4x1024xf32, #tpu.memory_space<vmem>>, vector<1x4x1024xf32>,
    return
  }
  func.func @transform_0(%arg0: i32) -> (i32, i32, i32) {
    %c0_i32 = arith.constant 0 : i32
    %c0_i32_0 = arith.constant 0 : i32
    %c0_i32_1 = arith.constant 0 : i32
    return %arg0, %c0_i32, %c0_i32_0 : i32, i32, i32
  }
  func.func @transform_1(%arg0: i32) -> (i32, i32, i32) {
    %c0_i32 = arith.constant 0 : i32
    %c0_i32_0 = arith.constant 0 : i32
    %c0_i32_1 = arith.constant 0 : i32
    return %arg0, %c0_i32, %c0_i32_0 : i32, i32, i32
  }
  func.func @transform_2(%arg0: i32) -> (i32, i32, i32) {
    %c0_i32 = arith.constant 0 : i32
    %c0_i32_0 = arith.constant 0 : i32
    %c0_i32_1 = arith.constant 0 : i32
    return %arg0, %c0_i32, %c0_i32_0 : i32, i32, i32
  }
  func.func @transform_3(%arg0: i32) -> (i32, i32) {
    %c0_i32 = arith.constant 0 : i32
    %c0_i32_0 = arith.constant 0 : i32
    %c0_i32_1 = arith.constant 0 : i32
    return %c0_i32, %c0_i32_0 : i32, i32
  }
  func.func @transform_4(%arg0: i32) -> (i32, i32) {
    %c0_i32 = arith.constant 0 : i32
    %c0_i32_0 = arith.constant 0 : i32
    %c0_i32_1 = arith.constant 0 : i32
    return %c0_i32, %c0_i32_0 : i32, i32
  }
  func.func @transform_5(%arg0: i32) -> (i32, i32) {
    %c0_i32 = arith.constant 0 : i32
    %c0_i32_0 = arith.constant 0 : i32
    %c0_i32_1 = arith.constant 0 : i32
    return %c0_i32, %c0_i32_0 : i32, i32
  }
  func.func @transform_6(%arg0: i32) -> (i32, i32) {
    %c0_i32 = arith.constant 0 : i32
    %c0_i32_0 = arith.constant 0 : i32
    %c0_i32_1 = arith.constant 0 : i32
    return %c0_i32, %c0_i32_0 : i32, i32
  }
  func.func @transform_7(%arg0: i32) -> (i32, i32, i32) {
    %c0_i32 = arith.constant 0 : i32
    %c0_i32_0 = arith.constant 0 : i32
    %c0_i32_1 = arith.constant 0 : i32
    return %arg0, %c0_i32, %c0_i32_0 : i32, i32, i32
  }
}

</mosaic_0001>

<llo_original>
// kernel: tile.14
$region0: #{tile.14}
  %s0 = inlined_call_operand.vmem [shape: f32[2,9,4], index: 0, kind: input, shape index: {}]
  %s1 = inlined_call_operand.vmem [shape: f32[2,36], index: 1, kind: output, shape index: {}]
  $region1: #{tile.14} parent=0
    #allocation0 [shape = 'u8[4096]{0}', space=vmem, size = 0x1000, scoped, tag = 'scoped mem for output reshape']
    %s2 = smov 3
    %v3 = vld [vmem:[%s0] ss:$16 sm:%s2]
    %vm4 = vcmask 31744
    %5 = vst.msk [vmem:[#allocation0] sm:$0x3] %vm4, %v3
    %s6 = scalar_lea.vmem %s0, 8
    %s7 = smov 3
    %v8 = vld [vmem:[%s6] ss:$16 sm:%s7]
    %9 = vrot.lane.b32.xlu0 %v8, 32
    %v10 = vpop.permute.xlu0 %9
    %vm11 = vcmask 294144
    %12 = vst.msk [vmem:[#allocation0] sm:$0x3] %vm11, %v10
    %s13 = scalar_lea.vmem %s0, 7
    %s14 = smov 3
    %v15 = vld [vmem:[%s13] ss:$16 sm:%s14]
    %16 = vrot.lane.b32.xlu0 %v15, 28
    %v17 = vpop.permute.xlu0 %16
    %vm18 = vcmask 261344
    %19 = vst.msk [vmem:[#allocation0] sm:$0x3] %vm18, %v17
    %s20 = scalar_lea.vmem %s0, 6
    %s21 = smov 3
    %v22 = vld [vmem:[%s20] ss:$16 sm:%s21]
    %23 = vrot.lane.b32.xlu0 %v22, 24
    %v24 = vpop.permute.xlu0 %23
    %vm25 = vcmask 228544
    %26 = vst.msk [vmem:[#allocation0] sm:$0x3] %vm25, %v24
    %s27 = scalar_lea.vmem %s0, 5
    %s28 = smov 3
    %v29 = vld [vmem:[%s27] ss:$16 sm:%s28]
    %30 = vrot.lane.b32.xlu0 %v29, 20
    %v31 = vpop.permute.xlu0 %30
    %vm32 = vcmask 195744
    %33 = vst.msk [vmem:[#allocation0] sm:$0x3] %vm32, %v31
    %s34 = scalar_lea.vmem %s0, 4
    %s35 = smov 3
    %v36 = vld [vmem:[%s34] ss:$16 sm:%s35]
    %37 = vrot.lane.b32.xlu0 %v36, 16
    %v38 = vpop.permute.xlu0 %37
    %vm39 = vcmask 162944
    %40 = vst.msk [vmem:[#allocation0] sm:$0x3] %vm39, %v38
    %s41 = scalar_lea.vmem %s0, 3
    %s42 = smov 3
    %v43 = vld [vmem:[%s41] ss:$16 sm:%s42]
    %44 = vrot.lane.b32.xlu0 %v43, 12
    %v45 = vpop.permute.xlu0 %44
    %vm46 = vcmask 130144
    %47 = vst.msk [vmem:[#allocation0] sm:$0x3] %vm46, %v45
    %s48 = scalar_lea.vmem %s0, 2
    %s49 = smov 3
    %v50 = vld [vmem:[%s48] ss:$16 sm:%s49]
    %51 = vrot.lane.b32.xlu0 %v50, 8
    %v52 = vpop.permute.xlu0 %51
    %vm53 = vcmask 97344
    %54 = vst.msk [vmem:[#allocation0] sm:$0x3] %vm53, %v52
    %s55 = scalar_lea.vmem %s0, 1
    %s56 = smov 3
    %v57 = vld [vmem:[%s55] ss:$16 sm:%s56]
    %58 = vrot.lane.b32.xlu0 %v57, 4
    %v59 = vpop.permute.xlu0 %58
    %vm60 = vcmask 64544
    %61 = vst.msk [vmem:[#allocation0] sm:$0x3] %vm60, %v59
    %s63 = sshllo.u32 0, 2
    %v65 = vld [vmem:[#allocation0] sm:%s63]
    %s66 = sshllo.u32 0, 2
    %67 = vst [vmem:[%s1] sm:%s66] %v65

// kernel: decoder_block_forward.1
$region0: #{decoder_block_forward.1}
  #allocation0 [shape = 'u32[]', space=smem, size = 0x4, offset = 0x4, fixed_abs, tag = 'smem constant byte address 0x4 - core index']
  #allocation1 [shape = 'u32[144,128]{1,0:T(1,128)}', space=vmem, size = 0x12000, scoped, tag = 'internal scratch']
  %s0 = inlined_call_operand.vmem [shape: bf16[2,4,1024], index: 0, kind: input, shape index: {}]
  %s1 = inlined_call_operand.vmem [shape: bf16[2,4,1024], index: 1, kind: input, shape index: {}]
  %s2 = inlined_call_operand.vmem [shape: f32[2,1,72], index: 2, kind: input, shape index: {}]
  %s3 = inlined_call_operand.vmem [shape: f32[8,72], index: 3, kind: input, shape index: {}]
  %s4 = inlined_call_operand.vmem [shape: f32[8,1], index: 4, kind: input, shape index: {}]
  %s5 = inlined_call_operand.vmem [shape: bf16[4,72], index: 5, kind: input, shape index: {}]
  %s6 = inlined_call_operand.vmem [shape: f32[4,1], index: 6, kind: input, shape index: {}]
  %s7 = inlined_call_operand.vmem [shape: f32[2,4,1024], index: 7, kind: output, shape index: {}]
  %s8 = sld [smem:[#allocation0]]
  $region61: #{decoder_block_forward.1} parent=0
    _
  %s10 = ssub.s32 1, %s8
  %s11 = scalar_select 0, %s10, %s8
  loop: start=0, step=1, limit=4
  $region2: #{decoder_block_forward.1} parent=0 // loop_pre_header
    _
  $region3: #{decoder_block_forward.1} parent=0 // loop_header
    %s13 = sphi 0, %s17
    %p14 = scmp.ge.s32.totalorder %s13, 4
    %s23 = sphi 0, %s25
    %s26 = sphi 0, %s23
    %s27 = sphi 0, %s26
    %s43 = sphi 0, %s27
    %s49 = sphi 0, %s51
    %s52 = sphi 0, %s49
    %s53 = sphi 0, %s52
    %s69 = sphi 0, %s53
    %s75 = sphi 0, %s77
    %s78 = sphi 0, %s75
    %s79 = sphi 0, %s78
    %s95 = sphi 0, %s79
    %s99 = sphi 0, %s99
    %s101 = sphi 0, %s99
    %s102 = sphi 0, %s101
    %s116 = sphi 0, %s102
    %s120 = sphi 0, %s120
    %s122 = sphi 0, %s120
    %s123 = sphi 0, %s122
    %s137 = sphi 0, %s123
    %s141 = sphi 0, %s141
    %s143 = sphi 0, %s141
    %s144 = sphi 0, %s143
    %s158 = sphi 0, %s144
    %s162 = sphi 0, %s162
    %s164 = sphi 0, %s162
    %s165 = sphi 0, %s164
    %s179 = sphi 0, %s165
    %s185 = sphi 0, %s187
    %s188 = sphi 0, %s185
    %s189 = sphi 0, %s188
    %s205 = sphi 0, %s189
  $region4: #{decoder_block_forward.1} parent=0 // loop_header_branch
    %16 = sbr.rel (%p14) target = $region8
  $region5: #{decoder_block_forward.1} parent=0 // loop_body
    %s18 = ssub.s32 %s13, 1
    %s19 = ssub.s32 %s13, 2
    %s20 = sadd.s32 %s13, 1
    %s21 = ssub.s32 %s13, %s20
    %p22 = scmp.eq.s32.totalorder %s21, 0
    %s24 = sadd.s32 %s23, 1
    %s25 = scalar_select %p22, %s23, %s24
    %p28 = pneg %p22
    %p29 = scmp.eq.s32.totalorder %s13, 1
    %p30 = por %p28, %p29
    %p31 = scmp.ne.s32.totalorder %s23, %s26
    %p32 = scmp.eq.s32.totalorder %s13, 0
    %p33 = por %p31, %p32
    %p34 = scmp.ne.s32.totalorder %s23, %s26
    %p35 = scmp.eq.s32.totalorder %s18, 1
    %p36 = por %p34, %p35
    %p37 = scmp.ne.s32.totalorder %s26, %s27
    %p38 = scmp.eq.s32.totalorder %s18, 0
    %p39 = por %p37, %p38
    %p40 = scmp.ne.s32.totalorder %s26, %s27
    %p41 = scmp.eq.s32.totalorder %s19, 1
    %p42 = por %p40, %p41
    %p44 = scmp.ne.s32.totalorder %s27, %s43
    %p45 = scmp.eq.s32.totalorder %s19, 0
    %p46 = por %p44, %p45
    %s47 = ssub.s32 %s13, %s20
    %p48 = scmp.eq.s32.totalorder %s47, 0
    %s50 = sadd.s32 %s49, 1
    %s51 = scalar_select %p48, %s49, %s50
    %p54 = pneg %p48
    %p55 = scmp.eq.s32.totalorder %s13, 1
    %p56 = por %p54, %p55
    %p57 = scmp.ne.s32.totalorder %s49, %s52
    %p58 = scmp.eq.s32.totalorder %s13, 0
    %p59 = por %p57, %p58
    %p60 = scmp.ne.s32.totalorder %s49, %s52
    %p61 = scmp.eq.s32.totalorder %s18, 1
    %p62 = por %p60, %p61
    %p63 = scmp.ne.s32.totalorder %s52, %s53
    %p64 = scmp.eq.s32.totalorder %s18, 0
    %p65 = por %p63, %p64
    %p66 = scmp.ne.s32.totalorder %s52, %s53
    %p67 = scmp.eq.s32.totalorder %s19, 1
    %p68 = por %p66, %p67
    %p70 = scmp.ne.s32.totalorder %s53, %s69
    %p71 = scmp.eq.s32.totalorder %s19, 0
    %p72 = por %p70, %p71
    %s73 = ssub.s32 %s13, %s20
    %p74 = scmp.eq.s32.totalorder %s73, 0
    %s76 = sadd.s32 %s75, 1
    %s77 = scalar_select %p74, %s75, %s76
    %p80 = pneg %p74
    %p81 = scmp.eq.s32.totalorder %s13, 1
    %p82 = por %p80, %p81
    %p83 = scmp.ne.s32.totalorder %s75, %s78
    %p84 = scmp.eq.s32.totalorder %s13, 0
    %p85 = por %p83, %p84
    %p86 = scmp.ne.s32.totalorder %s75, %s78
    %p87 = scmp.eq.s32.totalorder %s18, 1
    %p88 = por %p86, %p87
    %p89 = scmp.ne.s32.totalorder %s78, %s79
    %p90 = scmp.eq.s32.totalorder %s18, 0
    %p91 = por %p89, %p90
    %p92 = scmp.ne.s32.totalorder %s78, %s79
    %p93 = scmp.eq.s32.totalorder %s19, 1
    %p94 = por %p92, %p93
    %p96 = scmp.ne.s32.totalorder %s79, %s95
    %p97 = scmp.eq.s32.totalorder %s19, 0
    %p98 = por %p96, %p97
    %s100 = sadd.s32 %s99, 1
    %p103 = scmp.eq.s32.totalorder %s13, 1
    %p104 = scmp.ne.s32.totalorder %s99, %s101
    %p105 = scmp.eq.s32.totalorder %s13, 0
    %p106 = por %p104, %p105
    %p107 = scmp.ne.s32.totalorder %s99, %s101
    %p108 = scmp.eq.s32.totalorder %s18, 1
    %p109 = por %p107, %p108
    %p110 = scmp.ne.s32.totalorder %s101, %s102
    %p111 = scmp.eq.s32.totalorder %s18, 0
    %p112 = por %p110, %p111
    %p113 = scmp.ne.s32.totalorder %s101, %s102
    %p114 = scmp.eq.s32.totalorder %s19, 1
    %p115 = por %p113, %p114
    %p117 = scmp.ne.s32.totalorder %s102, %s116
    %p118 = scmp.eq.s32.totalorder %s19, 0
    %p119 = por %p117, %p118
    %s121 = sadd.s32 %s120, 1
    %p124 = scmp.eq.s32.totalorder %s13, 1
    %p125 = scmp.ne.s32.totalorder %s120, %s122
    %p126 = scmp.eq.s32.totalorder %s13, 0
    %p127 = por %p125, %p126
    %p128 = scmp.ne.s32.totalorder %s120, %s122
    %p129 = scmp.eq.s32.totalorder %s18, 1
    %p130 = por %p128, %p129
    %p131 = scmp.ne.s32.totalorder %s122, %s123
    %p132 = scmp.eq.s32.totalorder %s18, 0
    %p133 = por %p131, %p132
    %p134 = scmp.ne.s32.totalorder %s122, %s123
    %p135 = scmp.eq.s32.totalorder %s19, 1
    %p136 = por %p134, %p135
    %p138 = scmp.ne.s32.totalorder %s123, %s137
    %p139 = scmp.eq.s32.totalorder %s19, 0
    %p140 = por %p138, %p139
    %s142 = sadd.s32 %s141, 1
    %p145 = scmp.eq.s32.totalorder %s13, 1
    %p146 = scmp.ne.s32.totalorder %s141, %s143
    %p147 = scmp.eq.s32.totalorder %s13, 0
    %p148 = por %p146, %p147
    %p149 = scmp.ne.s32.totalorder %s141, %s143
    %p150 = scmp.eq.s32.totalorder %s18, 1
    %p151 = por %p149, %p150
    %p152 = scmp.ne.s32.totalorder %s143, %s144
    %p153 = scmp.eq.s32.totalorder %s18, 0
    %p154 = por %p152, %p153
    %p155 = scmp.ne.s32.totalorder %s143, %s144
    %p156 = scmp.eq.s32.totalorder %s19, 1
    %p157 = por %p155, %p156
    %p159 = scmp.ne.s32.totalorder %s144, %s158
    %p160 = scmp.eq.s32.totalorder %s19, 0
    %p161 = por %p159, %p160
    %s163 = sadd.s32 %s162, 1
    %p166 = scmp.eq.s32.totalorder %s13, 1
    %p167 = scmp.ne.s32.totalorder %s162, %s164
    %p168 = scmp.eq.s32.totalorder %s13, 0
    %p169 = por %p167, %p168
    %p170 = scmp.ne.s32.totalorder %s162, %s164
    %p171 = scmp.eq.s32.totalorder %s18, 1
    %p172 = por %p170, %p171
    %p173 = scmp.ne.s32.totalorder %s164, %s165
    %p174 = scmp.eq.s32.totalorder %s18, 0
    %p175 = por %p173, %p174
    %p176 = scmp.ne.s32.totalorder %s164, %s165
    %p177 = scmp.eq.s32.totalorder %s19, 1
    %p178 = por %p176, %p177
    %p180 = scmp.ne.s32.totalorder %s165, %s179
    %p181 = scmp.eq.s32.totalorder %s19, 0
    %p182 = por %p180, %p181
    %s183 = ssub.s32 %s13, %s20
    %p184 = scmp.eq.s32.totalorder %s183, 0
    %s186 = sadd.s32 %s185, 1
    %s187 = scalar_select %p184, %s185, %s186
    %p190 = pneg %p184
    %p191 = scmp.eq.s32.totalorder %s13, 1
    %p192 = por %p190, %p191
    %p193 = scmp.ne.s32.totalorder %s185, %s188
    %p194 = scmp.eq.s32.totalorder %s13, 0
    %p195 = por %p193, %p194
    %p196 = scmp.ne.s32.totalorder %s185, %s188
    %p197 = scmp.eq.s32.totalorder %s18, 1
    %p198 = por %p196, %p197
    %p199 = scmp.ne.s32.totalorder %s188, %s189
    %p200 = scmp.eq.s32.totalorder %s18, 0
    %p201 = por %p199, %p200
    %p202 = scmp.ne.s32.totalorder %s188, %s189
    %p203 = scmp.eq.s32.totalorder %s19, 1
    %p204 = por %p202, %p203
    %p206 = scmp.ne.s32.totalorder %s189, %s205
    %p207 = scmp.eq.s32.totalorder %s19, 0
    %p208 = por %p206, %p207
    %p209 = scmp.le.s32.totalorder 1, %s13
    %p210 = scmp.lt.s32.totalorder %s13, 3
    %p211 = pnand %p209, %p210
    %p212 = pneg %p211
    // Predicated region
    $region9: #{decoder_block_forward.1} parent=5 // pred_check
      _
    $region10: #{decoder_block_forward.1} parent=5 // pred_check_branch
      %214 = sbr.rel (%p211) target = $region12
    $region11: #{decoder_block_forward.1} parent=5 // pred_region
      %s215 = ssub.s32 %s13, 1
      // Predicated region
      $region13: #{decoder_block_forward.1} parent=11 // pred_check
        %p216 = pneg %p112
      $region14: #{decoder_block_forward.1} parent=11 // pred_check_branch
        %218 = sbr.rel (%p216) target = $region16
      $region15: #{decoder_block_forward.1} parent=11 // pred_region
        _
      $region16: #{decoder_block_forward.1} parent=11 // pred_fallthru
        _
      // Predicated region
      $region17: #{decoder_block_forward.1} parent=11 // pred_check
        %p219 = pneg %p133
      $region18: #{decoder_block_forward.1} parent=11 // pred_check_branch
        %221 = sbr.rel (%p219) target = $region20
      $region19: #{decoder_block_forward.1} parent=11 // pred_region
        _
      $region20: #{decoder_block_forward.1} parent=11 // pred_fallthru
        _
      // Predicated region
      $region21: #{decoder_block_forward.1} parent=11 // pred_check
        %p222 = pneg %p154
      $region22: #{decoder_block_forward.1} parent=11 // pred_check_branch
        %224 = sbr.rel (%p222) target = $region24
      $region23: #{decoder_block_forward.1} parent=11 // pred_region
        _
      $region24: #{decoder_block_forward.1} parent=11 // pred_fallthru
        _
      // Predicated region
      $region25: #{decoder_block_forward.1} parent=11 // pred_check
        %p225 = pneg %p175
      $region26: #{decoder_block_forward.1} parent=11 // pred_check_branch
        %227 = sbr.rel (%p225) target = $region28
      $region27: #{decoder_block_forward.1} parent=11 // pred_region
        _
      $region28: #{decoder_block_forward.1} parent=11 // pred_fallthru
        _
    $region12: #{decoder_block_forward.1} parent=5 // pred_fallthru
      _
    %p228 = scmp.lt.s32.totalorder %s13, 2
    // Predicated region
    $region29: #{decoder_block_forward.1} parent=5 // pred_check
      %p229 = pneg %p228
    $region30: #{decoder_block_forward.1} parent=5 // pred_check_branch
      %231 = sbr.rel (%p229) target = $region32
    $region31: #{decoder_block_forward.1} parent=5 // pred_region
      // Predicated region
      $region33: #{decoder_block_forward.1} parent=31 // pred_check
        %p232 = pneg %p33
      $region34: #{decoder_block_forward.1} parent=31 // pred_check_branch
        %234 = sbr.rel (%p232) target = $region36
      $region35: #{decoder_block_forward.1} parent=31 // pred_region
        %p235 = scmp.lt.s32.totalorder %s13, 1
        %s236 = scalar_select %p235, %s13, 1
        %s237 = smul.addr %s236, 8
        %s238 = smul.addr %s237, 2
        %s239 = scalar_lea.vmem %s0, %s238
      $region36: #{decoder_block_forward.1} parent=31 // pred_fallthru
        _
      // Predicated region
      $region37: #{decoder_block_forward.1} parent=31 // pred_check
        %p240 = pneg %p59
      $region38: #{decoder_block_forward.1} parent=31 // pred_check_branch
        %242 = sbr.rel (%p240) target = $region40
      $region39: #{decoder_block_forward.1} parent=31 // pred_region
        %p243 = scmp.lt.s32.totalorder %s13, 1
        %s244 = scalar_select %p243, %s13, 1
        %s245 = smul.addr %s244, 8
        %s246 = smul.addr %s245, 2
        %s247 = scalar_lea.vmem %s1, %s246
      $region40: #{decoder_block_forward.1} parent=31 // pred_fallthru
        _
      // Predicated region
      $region41: #{decoder_block_forward.1} parent=31 // pred_check
        %p248 = pneg %p85
      $region42: #{decoder_block_forward.1} parent=31 // pred_check_branch
        %250 = sbr.rel (%p248) target = $region44
      $region43: #{decoder_block_forward.1} parent=31 // pred_region
        %p251 = scmp.lt.s32.totalorder %s13, 1
        %s252 = scalar_select %p251, %s13, 1
        %s253 = scalar_lea.vmem %s2, %s252
      $region44: #{decoder_block_forward.1} parent=31 // pred_fallthru
        _
    $region32: #{decoder_block_forward.1} parent=5 // pred_fallthru
      _
    %p254 = scmp.le.s32.totalorder 1, %s13
    %p255 = scmp.lt.s32.totalorder %s13, 3
    %p256 = pnand %p254, %p255
    %p257 = pneg %p256
    // Predicated region
    $region45: #{decoder_block_forward.1} parent=5 // pred_check
      _
    $region46: #{decoder_block_forward.1} parent=5 // pred_check_branch
      %259 = sbr.rel (%p256) target = $region48
    $region47: #{decoder_block_forward.1} parent=5 // pred_region
      %s260 = ssub.s32 %s13, 1
      %p261 = scmp.lt.s32.totalorder %s18, 1
      %s262 = scalar_select %p261, %s18, 1
      %s263 = smul.addr %s262, 8
      %s264 = smul.addr %s263, 2
      %s265 = scalar_lea.vmem %s0, %s264
      %p266 = pneg %p39
      %p267 = pneg %p36
      %p268 = scmp.lt.s32.totalorder %s18, 1
      %s269 = scalar_select %p268, %s18, 1
      %s270 = smul.addr %s269, 8
      %s271 = smul.addr %s270, 2
      %s272 = scalar_lea.vmem %s1, %s271
      %p273 = pneg %p65
      %p274 = pneg %p62
      %p275 = scmp.lt.s32.totalorder %s18, 1
      %s276 = scalar_select %p275, %s18, 1
      %s277 = scalar_lea.vmem %s2, %s276
      %p278 = pneg %p91
      %p279 = pneg %p88
      %p280 = pneg %p112
      %p281 = pneg %p109
      %p282 = pneg %p133
      %p283 = pneg %p130
      %p284 = pneg %p154
      %p285 = pneg %p151
      %p286 = pneg %p175
      %p287 = pneg %p172
      %p288 = pneg %p201
      %p289 = pneg %p198
      %p290 = scmp.lt.s32.totalorder %s18, 1
      %s291 = scalar_select %p290, %s18, 1
      %s292 = smul.addr %s291, 8
      %s293 = smul.addr %s292, 4
      %s294 = scalar_lea.vmem %s7, %s293
      %p295 = scmp.lt.s32.totalorder %s18, 1
      %s296 = scalar_select %p295, %s18, 1
      %s297 = smul.addr %s296, 8
      %s298 = smul.addr %s297, 2
      %s299 = scalar_lea.vmem %s0, %s298
      %p300 = scmp.lt.s32.totalorder %s18, 1
      %s301 = scalar_select %p300, %s18, 1
      %s302 = smul.addr %s301, 8
      %s303 = smul.addr %s302, 2
      %s304 = scalar_lea.vmem %s1, %s303
      %p305 = scmp.lt.s32.totalorder %s18, 1
      %s306 = scalar_select %p305, %s18, 1
      %s307 = scalar_lea.vmem %s2, %s306
      %p308 = scmp.lt.s32.totalorder %s18, 1
      %s309 = scalar_select %p308, %s18, 1
      %s310 = smul.addr %s309, 8
      %s311 = smul.addr %s310, 4
      %s312 = scalar_lea.vmem %s7, %s311
      %v316 = vlaneseq
      %v317 = vand.u32 %v316, 127
      %v318 = vadd.s32 %v317, 128
      %v319 = vadd.s32 %v317, 256
      %v320 = vadd.s32 %v317, 384
      %v321 = vadd.s32 %v317, 512
      %v322 = vadd.s32 %v317, 640
      %v323 = vadd.s32 %v317, 768
      %v324 = vadd.s32 %v317, 896
      %vm325 = vcmp.lt.s32.totalorder %v317, 0
      %v326 = vsub.s32 0, %v317
      %v327 = vsel %vm325, %v326, %v317
      %v328 = vshrl.u32 %v327, 5
      %v329 = vand.u32 %v327, 31
      %v330 = vsub.s32 0, %v329
      %v331 = vsel %vm325, %v330, %v329
      %vm332 = vcmp.lt.s32.totalorder %v318, 0
      %v333 = vsub.s32 0, %v318
      %v334 = vsel %vm332, %v333, %v318
      %v335 = vshrl.u32 %v334, 5
      %v336 = vand.u32 %v334, 31
      %v337 = vsub.s32 0, %v336
      %v338 = vsel %vm332, %v337, %v336
      %vm339 = vcmp.lt.s32.totalorder %v319, 0
      %v340 = vsub.s32 0, %v319
      %v341 = vsel %vm339, %v340, %v319
      %v342 = vshrl.u32 %v341, 5
      %v343 = vand.u32 %v341, 31
      %v344 = vsub.s32 0, %v343
      %v345 = vsel %vm339, %v344, %v343
      %vm346 = vcmp.lt.s32.totalorder %v320, 0
      %v347 = vsub.s32 0, %v320
      %v348 = vsel %vm346, %v347, %v320
      %v349 = vshrl.u32 %v348, 5
      %v350 = vand.u32 %v348, 31
      %v351 = vsub.s32 0, %v350
      %v352 = vsel %vm346, %v351, %v350
      %vm353 = vcmp.lt.s32.totalorder %v321, 0
      %v354 = vsub.s32 0, %v321
      %v355 = vsel %vm353, %v354, %v321
      %v356 = vshrl.u32 %v355, 5
      %v357 = vand.u32 %v355, 31
      %v358 = vsub.s32 0, %v357
      %v359 = vsel %vm353, %v358, %v357
      %vm360 = vcmp.lt.s32.totalorder %v322, 0
      %v361 = vsub.s32 0, %v322
      %v362 = vsel %vm360, %v361, %v322
      %v363 = vshrl.u32 %v362, 5
      %v364 = vand.u32 %v362, 31
      %v365 = vsub.s32 0, %v364
      %v366 = vsel %vm360, %v365, %v364
      %vm367 = vcmp.lt.s32.totalorder %v323, 0
      %v368 = vsub.s32 0, %v323
      %v369 = vsel %vm367, %v368, %v323
      %v370 = vshrl.u32 %v369, 5
      %v371 = vand.u32 %v369, 31
      %v372 = vsub.s32 0, %v371
      %v373 = vsel %vm367, %v372, %v371
      %vm374 = vcmp.lt.s32.totalorder %v324, 0
      %v375 = vsub.s32 0, %v324
      %v376 = vsel %vm374, %v375, %v324
      %v377 = vshrl.u32 %v376, 5
      %v378 = vand.u32 %v376, 31
      %v379 = vsub.s32 0, %v378
      %v380 = vsel %vm374, %v379, %v378
      %vm381 = vcmp.ne.s32.totalorder %v331, 0
      %vm382 = vcmp.ne.s32.totalorder %v338, 0
      %vm383 = vcmp.ne.s32.totalorder %v345, 0
      %vm384 = vcmp.ne.s32.totalorder %v352, 0
      %vm385 = vcmp.ne.s32.totalorder %v359, 0
      %vm386 = vcmp.ne.s32.totalorder %v366, 0
      %vm387 = vcmp.ne.s32.totalorder %v373, 0
      %vm388 = vcmp.ne.s32.totalorder %v380, 0
      %vm389 = vcmp.lt.s32.totalorder %v331, 0
      %vm390 = vcmp.lt.s32.totalorder %v338, 0
      %vm391 = vcmp.lt.s32.totalorder %v345, 0
      %vm392 = vcmp.lt.s32.totalorder %v352, 0
      %vm393 = vcmp.lt.s32.totalorder %v359, 0
      %vm394 = vcmp.lt.s32.totalorder %v366, 0
      %vm395 = vcmp.lt.s32.totalorder %v373, 0
      %vm396 = vcmp.lt.s32.totalorder %v380, 0
      %vm397 = vmand %vm389, %vm381
      %vm398 = vmand %vm390, %vm382
      %vm399 = vmand %vm391, %vm383
      %vm400 = vmand %vm392, %vm384
      %vm401 = vmand %vm393, %vm385
      %vm402 = vmand %vm394, %vm386
      %vm403 = vmand %vm395, %vm387
      %vm404 = vmand %vm396, %vm388
      %v405 = vadd.s32 %v331, 32
      %v406 = vadd.s32 %v338, 32
      %v407 = vadd.s32 %v345, 32
      %v408 = vadd.s32 %v352, 32
      %v409 = vadd.s32 %v359, 32
      %v410 = vadd.s32 %v366, 32
      %v411 = vadd.s32 %v373, 32
      %v412 = vadd.s32 %v380, 32
      %v413 = vsel %vm397, %v405, %v331
      %v414 = vsel %vm398, %v406, %v338
      %v415 = vsel %vm399, %v407, %v345
      %v416 = vsel %vm400, %v408, %v352
      %v417 = vsel %vm401, %v409, %v359
      %v418 = vsel %vm402, %v410, %v366
      %v419 = vsel %vm403, %v411, %v373
      %v420 = vsel %vm404, %v412, %v380
      %vm421 = vcmp.ge.s32.totalorder %v413, 1
      %vm422 = vcmp.ge.s32.totalorder %v414, 1
      %vm423 = vcmp.ge.s32.totalorder %v415, 1
      %vm424 = vcmp.ge.s32.totalorder %v416, 1
      %vm425 = vcmp.ge.s32.totalorder %v417, 1
      %vm426 = vcmp.ge.s32.totalorder %v418, 1
      %vm427 = vcmp.ge.s32.totalorder %v419, 1
      %vm428 = vcmp.ge.s32.totalorder %v420, 1
      %vm429 = vcmp.le.s32.totalorder %v413, 30
      %vm430 = vcmp.le.s32.totalorder %v414, 30
      %vm431 = vcmp.le.s32.totalorder %v415, 30
      %vm432 = vcmp.le.s32.totalorder %v416, 30
      %vm433 = vcmp.le.s32.totalorder %v417, 30
      %vm434 = vcmp.le.s32.totalorder %v418, 30
      %vm435 = vcmp.le.s32.totalorder %v419, 30
      %vm436 = vcmp.le.s32.totalorder %v420, 30
      %v437 = vld [vmem:[%s299] sm:$0xff]
      %v438 = vld [vmem:[%s299 + $0x8] sm:$0xff]
      %v441 = vcombine.high %v437, %v437
      %v443 = vunpack.c.l.s4 1983009808
      %v444 = vunpack.c.0.s8 %v443
      %v445 = vlaneseq
      %v446 = vshrl.u32 %v445, 7
      %v447 = vsub.s32 %v444, %v446
      %v448 = vrot.slane %v437, %v447
      %v450 = vunpack.c.l.s4 1983009808
      %v451 = vunpack.c.0.s8 %v450
      %v452 = vlaneseq
      %v453 = vshrl.u32 %v452, 7
      %v454 = vsub.s32 %v451, %v453
      %v455 = vrot.slane %v441, %v454
      %v456 = vcombine.high %v448, %v448
      %v457 = vcombine.high %v455, %v455
      %v458 = vcombine.high %v438, %v438
      %v460 = vunpack.c.l.s4 1983009808
      %v461 = vunpack.c.0.s8 %v460
      %v462 = vlaneseq
      %v463 = vshrl.u32 %v462, 7
      %v464 = vsub.s32 %v461, %v463
      %v465 = vrot.slane %v438, %v464
      %v467 = vunpack.c.l.s4 1983009808
      %v468 = vunpack.c.0.s8 %v467
      %v469 = vlaneseq
      %v470 = vshrl.u32 %v469, 7
      %v471 = vsub.s32 %v468, %v470
      %v472 = vrot.slane %v458, %v471
      %v473 = vcombine.high %v465, %v465
      %v474 = vcombine.high %v472, %v472
      %475 = vrot.lane.b32.xlu0 %v448, 33
      %v476 = vpop.permute.xlu0 %475
      %477 = vrot.lane.b32.xlu0 %v456, 33
      %v478 = vpop.permute.xlu0 %477
      %479 = vrot.lane.b32.xlu0 %v455, 33
      %v480 = vpop.permute.xlu0 %479
      %481 = vrot.lane.b32.xlu0 %v457, 33
      %v482 = vpop.permute.xlu0 %481
      %483 = vrot.lane.b32.xlu0 %v465, 33
      %v484 = vpop.permute.xlu0 %483
      %485 = vrot.lane.b32.xlu0 %v473, 33
      %v486 = vpop.permute.xlu0 %485
      %487 = vrot.lane.b32.xlu0 %v472, 33
      %v488 = vpop.permute.xlu0 %487
      %489 = vrot.lane.b32.xlu0 %v474, 33
      %v490 = vpop.permute.xlu0 %489
      %vm491 = vcmask 269312
      %v492 = vsel %vm491, %v476, %v478
      %v493 = vsel %vm491, %v478, %v480
      %v494 = vsel %vm491, %v480, %v482
      %v495 = vsel %vm491, %v482, %v484
      %v496 = vsel %vm491, %v484, %v486
      %v497 = vsel %vm491, %v486, %v488
      %v498 = vsel %vm491, %v488, %v490
      %vm506 = vcmask 269312
      %v509 = vsel %vm506, 0, %v476
      %v512 = vsel %vm506, %v490, 0
      %v514 = vsel %vm421, 1, 0
      %v515 = vsel %vm422, 1, 0
      %v516 = vsel %vm423, 1, 0
      %v517 = vsel %vm424, 1, 0
      %v518 = vsel %vm425, 1, 0
      %v519 = vsel %vm426, 1, 0
      %v520 = vsel %vm427, 1, 0
      %v521 = vsel %vm428, 1, 0
      %vm522 = vcmp.eq.s32.totalorder %v514, 1
      %vm523 = vcmp.eq.s32.totalorder %v515, 1
      %vm524 = vcmp.eq.s32.totalorder %v516, 1
      %vm525 = vcmp.eq.s32.totalorder %v517, 1
      %vm526 = vcmp.eq.s32.totalorder %v518, 1
      %vm527 = vcmp.eq.s32.totalorder %v519, 1
      %vm528 = vcmp.eq.s32.totalorder %v520, 1
      %vm529 = vcmp.eq.s32.totalorder %v521, 1
      %vm530 = vmpackc.low %vm523, %vm522
      %vm531 = vmpackc.low %vm525, %vm524
      %vm532 = vmpackc.low %vm527, %vm526
      %vm533 = vmpackc.low %vm529, %vm528
      %v534 = vsel %vm530, 65537, 0
      %v535 = vsel %vm531, 65537, 0
      %v536 = vsel %vm532, 65537, 0
      %v537 = vsel %vm533, 65537, 0
      %v538 = vlaneseq
      %v539 = vshrl.u32 %v538, 7
      %v540 = vsub.s32 0, %v539
      %v541 = vrot.slane %v534, %v540
      %v542 = vlaneseq
      %v543 = vshrl.u32 %v542, 7
      %v544 = vsub.s32 4, %v543
      %v545 = vrot.slane %v534, %v544
      %v546 = vlaneseq
      %v547 = vshrl.u32 %v546, 7
      %v548 = vsub.s32 0, %v547
      %v549 = vrot.slane %v535, %v548
      %v550 = vlaneseq
      %v551 = vshrl.u32 %v550, 7
      %v552 = vsub.s32 4, %v551
      %v553 = vrot.slane %v535, %v552
      %v554 = vlaneseq
      %v555 = vshrl.u32 %v554, 7
      %v556 = vsub.s32 0, %v555
      %v557 = vrot.slane %v536, %v556
      %v558 = vlaneseq
      %v559 = vshrl.u32 %v558, 7
      %v560 = vsub.s32 4, %v559
      %v561 = vrot.slane %v536, %v560
      %v562 = vlaneseq
      %v563 = vshrl.u32 %v562, 7
      %v564 = vsub.s32 0, %v563
      %v565 = vrot.slane %v537, %v564
      %v566 = vlaneseq
      %v567 = vshrl.u32 %v566, 7
      %v568 = vsub.s32 4, %v567
      %v569 = vrot.slane %v537, %v568
      %vm570 = vcmp.ne.s16.totalorder %v541, 0
      %vm571 = vcmp.ne.s16.totalorder %v545, 0
      %vm572 = vcmp.ne.s16.totalorder %v549, 0
      %vm573 = vcmp.ne.s16.totalorder %v553, 0
      %vm574 = vcmp.ne.s16.totalorder %v557, 0
      %vm575 = vcmp.ne.s16.totalorder %v561, 0
      %vm576 = vcmp.ne.s16.totalorder %v565, 0
      %vm577 = vcmp.ne.s16.totalorder %v569, 0
      %v578 = vsel %vm570, %v509, 0
      %v579 = vsel %vm571, %v492, 0
      %v580 = vsel %vm572, %v493, 0
      %v581 = vsel %vm573, %v494, 0
      %v582 = vsel %vm574, %v495, 0
      %v583 = vsel %vm575, %v496, 0
      %v584 = vsel %vm576, %v497, 0
      %v585 = vsel %vm577, %v498, 0
      %v586 = vsel %vm429, 1, 0
      %v587 = vsel %vm430, 1, 0
      %v588 = vsel %vm431, 1, 0
      %v589 = vsel %vm432, 1, 0
      %v590 = vsel %vm433, 1, 0
      %v591 = vsel %vm434, 1, 0
      %v592 = vsel %vm435, 1, 0
      %v593 = vsel %vm436, 1, 0
      %vm594 = vcmp.eq.s32.totalorder %v586, 1
      %vm595 = vcmp.eq.s32.totalorder %v587, 1
      %vm596 = vcmp.eq.s32.totalorder %v588, 1
      %vm597 = vcmp.eq.s32.totalorder %v589, 1
      %vm598 = vcmp.eq.s32.totalorder %v590, 1
      %vm599 = vcmp.eq.s32.totalorder %v591, 1
      %vm600 = vcmp.eq.s32.totalorder %v592, 1
      %vm601 = vcmp.eq.s32.totalorder %v593, 1
      %vm602 = vmpackc.low %vm595, %vm594
      %vm603 = vmpackc.low %vm597, %vm596
      %vm604 = vmpackc.low %vm599, %vm598
      %vm605 = vmpackc.low %vm601, %vm600
      %v606 = vsel %vm602, 65537, 0
      %v607 = vsel %vm603, 65537, 0
      %v608 = vsel %vm604, 65537, 0
      %v609 = vsel %vm605, 65537, 0
      %v610 = vlaneseq
      %v611 = vshrl.u32 %v610, 7
      %v612 = vsub.s32 0, %v611
      %v613 = vrot.slane %v606, %v612
      %v614 = vlaneseq
      %v615 = vshrl.u32 %v614, 7
      %v616 = vsub.s32 4, %v615
      %v617 = vrot.slane %v606, %v616
      %v618 = vlaneseq
      %v619 = vshrl.u32 %v618, 7
      %v620 = vsub.s32 0, %v619
      %v621 = vrot.slane %v607, %v620
      %v622 = vlaneseq
      %v623 = vshrl.u32 %v622, 7
      %v624 = vsub.s32 4, %v623
      %v625 = vrot.slane %v607, %v624
      %v626 = vlaneseq
      %v627 = vshrl.u32 %v626, 7
      %v628 = vsub.s32 0, %v627
      %v629 = vrot.slane %v608, %v628
      %v630 = vlaneseq
      %v631 = vshrl.u32 %v630, 7
      %v632 = vsub.s32 4, %v631
      %v633 = vrot.slane %v608, %v632
      %v634 = vlaneseq
      %v635 = vshrl.u32 %v634, 7
      %v636 = vsub.s32 0, %v635
      %v637 = vrot.slane %v609, %v636
      %v638 = vlaneseq
      %v639 = vshrl.u32 %v638, 7
      %v640 = vsub.s32 4, %v639
      %v641 = vrot.slane %v609, %v640
      %642 = vrot.lane.b32.xlu0 %v613, 2
      %v643 = vpop.permute.xlu0 %642
      %644 = vrot.lane.b32.xlu0 %v617, 2
      %v645 = vpop.permute.xlu0 %644
      %646 = vrot.lane.b32.xlu0 %v621, 2
      %v647 = vpop.permute.xlu0 %646
      %648 = vrot.lane.b32.xlu0 %v625, 2
      %v649 = vpop.permute.xlu0 %648
      %650 = vrot.lane.b32.xlu0 %v629, 2
      %v651 = vpop.permute.xlu0 %650
      %652 = vrot.lane.b32.xlu0 %v633, 2
      %v653 = vpop.permute.xlu0 %652
      %654 = vrot.lane.b32.xlu0 %v637, 2
      %v655 = vpop.permute.xlu0 %654
      %656 = vrot.lane.b32.xlu0 %v641, 2
      %v657 = vpop.permute.xlu0 %656
      %vm658 = vcmask 15360
      %v659 = vsel %vm658, %v643, %v645
      %v660 = vsel %vm658, %v645, %v647
      %v661 = vsel %vm658, %v647, %v649
      %v662 = vsel %vm658, %v649, %v651
      %v663 = vsel %vm658, %v651, %v653
      %v664 = vsel %vm658, %v653, %v655
      %v665 = vsel %vm658, %v655, %v657
      %vm666 = vcmp.ne.s16.totalorder %v643, 0
      %vm667 = vcmp.ne.s16.totalorder %v659, 0
      %vm668 = vcmp.ne.s16.totalorder %v660, 0
      %vm669 = vcmp.ne.s16.totalorder %v661, 0
      %vm670 = vcmp.ne.s16.totalorder %v662, 0
      %vm671 = vcmp.ne.s16.totalorder %v663, 0
      %vm672 = vcmp.ne.s16.totalorder %v664, 0
      %vm673 = vcmp.ne.s16.totalorder %v665, 0
      %vm674 = vcmp.ne.s16.totalorder %v657, 0
      %v675 = vsel %vm666, %v509, 0
      %v676 = vsel %vm667, %v492, 0
      %v677 = vsel %vm668, %v493, 0
      %v678 = vsel %vm669, %v494, 0
      %v679 = vsel %vm670, %v495, 0
      %v680 = vsel %vm671, %v496, 0
      %v681 = vsel %vm672, %v497, 0
      %v682 = vsel %vm673, %v498, 0
      %v683 = vsel %vm674, %v512, 0
      %684 = vrot.lane.b32.xlu0 %v541, 32
      %v685 = vpop.permute.xlu0 %684
      %686 = vrot.lane.b32.xlu0 %v545, 32
      %v687 = vpop.permute.xlu0 %686
      %688 = vrot.lane.b32.xlu0 %v549, 32
      %v689 = vpop.permute.xlu0 %688
      %690 = vrot.lane.b32.xlu0 %v553, 32
      %v691 = vpop.permute.xlu0 %690
      %692 = vrot.lane.b32.xlu0 %v557, 32
      %v693 = vpop.permute.xlu0 %692
      %694 = vrot.lane.b32.xlu0 %v561, 32
      %v695 = vpop.permute.xlu0 %694
      %696 = vrot.lane.b32.xlu0 %v565, 32
      %v697 = vpop.permute.xlu0 %696
      %698 = vrot.lane.b32.xlu0 %v569, 32
      %v699 = vpop.permute.xlu0 %698
      %vm700 = vcmask 261120
      %v701 = vsel %vm700, %v685, %v687
      %v702 = vsel %vm700, %v687, %v689
      %v703 = vsel %vm700, %v689, %v691
      %v704 = vsel %vm700, %v691, %v693
      %v705 = vsel %vm700, %v693, %v695
      %v706 = vsel %vm700, %v695, %v697
      %v707 = vsel %vm700, %v697, %v699
      %vm708 = vcmp.ne.s16.totalorder %v685, 0
      %vm709 = vcmp.ne.s16.totalorder %v701, 0
      %vm710 = vcmp.ne.s16.totalorder %v702, 0
      %vm711 = vcmp.ne.s16.totalorder %v703, 0
      %vm712 = vcmp.ne.s16.totalorder %v704, 0
      %vm713 = vcmp.ne.s16.totalorder %v705, 0
      %vm714 = vcmp.ne.s16.totalorder %v706, 0
      %vm715 = vcmp.ne.s16.totalorder %v707, 0
      %vm716 = vcmp.ne.s16.totalorder %v699, 0
      %v717 = vsel %vm708, %v509, 0
      %v718 = vsel %vm709, %v492, 0
      %v719 = vsel %vm710, %v493, 0
      %v720 = vsel %vm711, %v494, 0
      %v721 = vsel %vm712, %v495, 0
      %v722 = vsel %vm713, %v496, 0
      %v723 = vsel %vm714, %v497, 0
      %v724 = vsel %vm715, %v498, 0
      %v725 = vsel %vm716, %v512, 0
      %726 = vrot.lane.b32.xlu0 %v613, 34
      %v727 = vpop.permute.xlu0 %726
      %728 = vrot.lane.b32.xlu0 %v617, 34
      %v729 = vpop.permute.xlu0 %728
      %730 = vrot.lane.b32.xlu0 %v621, 34
      %v731 = vpop.permute.xlu0 %730
      %732 = vrot.lane.b32.xlu0 %v625, 34
      %v733 = vpop.permute.xlu0 %732
      %734 = vrot.lane.b32.xlu0 %v629, 34
      %v735 = vpop.permute.xlu0 %734
      %736 = vrot.lane.b32.xlu0 %v633, 34
      %v737 = vpop.permute.xlu0 %736
      %738 = vrot.lane.b32.xlu0 %v637, 34
      %v739 = vpop.permute.xlu0 %738
      %740 = vrot.lane.b32.xlu0 %v641, 34
      %v741 = vpop.permute.xlu0 %740
      %vm742 = vcmask 277504
      %v743 = vsel %vm742, %v727, %v729
      %v744 = vsel %vm742, %v729, %v731
      %v745 = vsel %vm742, %v731, %v733
      %v746 = vsel %vm742, %v733, %v735
      %v747 = vsel %vm742, %v735, %v737
      %v748 = vsel %vm742, %v737, %v739
      %v749 = vsel %vm742, %v739, %v741
      %vm750 = vcmp.ne.s16.totalorder %v727, 0
      %vm751 = vcmp.ne.s16.totalorder %v743, 0
      %vm752 = vcmp.ne.s16.totalorder %v744, 0
      %vm753 = vcmp.ne.s16.totalorder %v745, 0
      %vm754 = vcmp.ne.s16.totalorder %v746, 0
      %vm755 = vcmp.ne.s16.totalorder %v747, 0
      %vm756 = vcmp.ne.s16.totalorder %v748, 0
      %vm757 = vcmp.ne.s16.totalorder %v749, 0
      %vm758 = vcmp.ne.s16.totalorder %v741, 0
      %v759 = vsel %vm750, %v509, 0
      %v760 = vsel %vm751, %v492, 0
      %v761 = vsel %vm752, %v493, 0
      %v762 = vsel %vm753, %v494, 0
      %v763 = vsel %vm754, %v495, 0
      %v764 = vsel %vm755, %v496, 0
      %v765 = vsel %vm756, %v497, 0
      %v766 = vsel %vm757, %v498, 0
      %v767 = vsel %vm758, %v512, 0
      %768 = vrot.lane.b32.xlu0 %v541, 64
      %v769 = vpop.permute.xlu0 %768
      %770 = vrot.lane.b32.xlu0 %v545, 64
      %v771 = vpop.permute.xlu0 %770
      %772 = vrot.lane.b32.xlu0 %v549, 64
      %v773 = vpop.permute.xlu0 %772
      %774 = vrot.lane.b32.xlu0 %v553, 64
      %v775 = vpop.permute.xlu0 %774
      %776 = vrot.lane.b32.xlu0 %v557, 64
      %v777 = vpop.permute.xlu0 %776
      %778 = vrot.lane.b32.xlu0 %v561, 64
      %v779 = vpop.permute.xlu0 %778
      %780 = vrot.lane.b32.xlu0 %v565, 64
      %v781 = vpop.permute.xlu0 %780
      %782 = vrot.lane.b32.xlu0 %v569, 64
      %v783 = vpop.permute.xlu0 %782
      %vm784 = vcmask 523264
      %v785 = vsel %vm784, %v769, %v771
      %v786 = vsel %vm784, %v771, %v773
      %v787 = vsel %vm784, %v773, %v775
      %v788 = vsel %vm784, %v775, %v777
      %v789 = vsel %vm784, %v777, %v779
      %v790 = vsel %vm784, %v779, %v781
      %v791 = vsel %vm784, %v781, %v783
      %vm792 = vcmp.ne.s16.totalorder %v769, 0
      %vm793 = vcmp.ne.s16.totalorder %v785, 0
      %vm794 = vcmp.ne.s16.totalorder %v786, 0
      %vm795 = vcmp.ne.s16.totalorder %v787, 0
      %vm796 = vcmp.ne.s16.totalorder %v788, 0
      %vm797 = vcmp.ne.s16.totalorder %v789, 0
      %vm798 = vcmp.ne.s16.totalorder %v790, 0
      %vm799 = vcmp.ne.s16.totalorder %v791, 0
      %vm800 = vcmp.ne.s16.totalorder %v783, 0
      %v801 = vsel %vm792, %v509, 0
      %v802 = vsel %vm793, %v492, 0
      %v803 = vsel %vm794, %v493, 0
      %v804 = vsel %vm795, %v494, 0
      %v805 = vsel %vm796, %v495, 0
      %v806 = vsel %vm797, %v496, 0
      %v807 = vsel %vm798, %v497, 0
      %v808 = vsel %vm799, %v498, 0
      %v809 = vsel %vm800, %v512, 0
      %810 = vrot.lane.b32.xlu0 %v613, 66
      %v811 = vpop.permute.xlu0 %810
      %812 = vrot.lane.b32.xlu0 %v617, 66
      %v813 = vpop.permute.xlu0 %812
      %814 = vrot.lane.b32.xlu0 %v621, 66
      %v815 = vpop.permute.xlu0 %814
      %816 = vrot.lane.b32.xlu0 %v625, 66
      %v817 = vpop.permute.xlu0 %816
      %818 = vrot.lane.b32.xlu0 %v629, 66
      %v819 = vpop.permute.xlu0 %818
      %820 = vrot.lane.b32.xlu0 %v633, 66
      %v821 = vpop.permute.xlu0 %820
      %822 = vrot.lane.b32.xlu0 %v637, 66
      %v823 = vpop.permute.xlu0 %822
      %824 = vrot.lane.b32.xlu0 %v641, 66
      %v825 = vpop.permute.xlu0 %824
      %vm826 = vcmask 539648
      %v827 = vsel %vm826, %v811, %v813
      %v828 = vsel %vm826, %v813, %v815
      %v829 = vsel %vm826, %v815, %v817
      %v830 = vsel %vm826, %v817, %v819
      %v831 = vsel %vm826, %v819, %v821
      %v832 = vsel %vm826, %v821, %v823
      %v833 = vsel %vm826, %v823, %v825
      %vm834 = vcmp.ne.s16.totalorder %v811, 0
      %vm835 = vcmp.ne.s16.totalorder %v827, 0
      %vm836 = vcmp.ne.s16.totalorder %v828, 0
      %vm837 = vcmp.ne.s16.totalorder %v829, 0
      %vm838 = vcmp.ne.s16.totalorder %v830, 0
      %vm839 = vcmp.ne.s16.totalorder %v831, 0
      %vm840 = vcmp.ne.s16.totalorder %v832, 0
      %vm841 = vcmp.ne.s16.totalorder %v833, 0
      %vm842 = vcmp.ne.s16.totalorder %v825, 0
      %v843 = vsel %vm834, %v509, 0
      %v844 = vsel %vm835, %v492, 0
      %v845 = vsel %vm836, %v493, 0
      %v846 = vsel %vm837, %v494, 0
      %v847 = vsel %vm838, %v495, 0
      %v848 = vsel %vm839, %v496, 0
      %v849 = vsel %vm840, %v497, 0
      %v850 = vsel %vm841, %v498, 0
      %v851 = vsel %vm842, %v512, 0
      %v854 = vrot.slane %v509, 6
      %v855 = vrot.slane %v492, 6
      %v856 = vrot.slane %v493, 6
      %v857 = vrot.slane %v494, 6
      %v858 = vrot.slane %v495, 6
      %v859 = vrot.slane %v496, 6
      %v860 = vrot.slane %v497, 6
      %v861 = vrot.slane %v498, 6
      %v862 = vrot.slane %v512, 6
      %863 = vrot.lane.b32.xlu0 %v854, 127
      %v864 = vpop.permute.xlu0 %863
      %865 = vrot.lane.b32.xlu0 %v855, 127
      %v866 = vpop.permute.xlu0 %865
      %867 = vrot.lane.b32.xlu0 %v856, 127
      %v868 = vpop.permute.xlu0 %867
      %869 = vrot.lane.b32.xlu0 %v857, 127
      %v870 = vpop.permute.xlu0 %869
      %871 = vrot.lane.b32.xlu0 %v858, 127
      %v872 = vpop.permute.xlu0 %871
      %873 = vrot.lane.b32.xlu0 %v859, 127
      %v874 = vpop.permute.xlu0 %873
      %875 = vrot.lane.b32.xlu0 %v860, 127
      %v876 = vpop.permute.xlu0 %875
      %877 = vrot.lane.b32.xlu0 %v861, 127
      %v878 = vpop.permute.xlu0 %877
      %879 = vrot.lane.b32.xlu0 %v862, 127
      %v880 = vpop.permute.xlu0 %879
      %vm881 = vcmask 1039360
      %v882 = vsel %vm881, %v864, %v866
      %v883 = vsel %vm881, %v866, %v868
      %v884 = vsel %vm881, %v868, %v870
      %v885 = vsel %vm881, %v870, %v872
      %v886 = vsel %vm881, %v872, %v874
      %v887 = vsel %vm881, %v874, %v876
      %v888 = vsel %vm881, %v876, %v878
      %v889 = vsel %vm881, %v878, %v880
      %v899 = vrot.slane %v675, 4
      %v900 = vrot.slane %v676, 4
      %v901 = vrot.slane %v677, 4
      %v902 = vrot.slane %v678, 4
      %v903 = vrot.slane %v679, 4
      %v904 = vrot.slane %v680, 4
      %v905 = vrot.slane %v681, 4
      %v906 = vrot.slane %v682, 4
      %v907 = vrot.slane %v683, 4
      %908 = vrot.lane.b32.xlu0 %v899, 126
      %v909 = vpop.permute.xlu0 %908
      %910 = vrot.lane.b32.xlu0 %v900, 126
      %v911 = vpop.permute.xlu0 %910
      %912 = vrot.lane.b32.xlu0 %v901, 126
      %v913 = vpop.permute.xlu0 %912
      %914 = vrot.lane.b32.xlu0 %v902, 126
      %v915 = vpop.permute.xlu0 %914
      %916 = vrot.lane.b32.xlu0 %v903, 126
      %v917 = vpop.permute.xlu0 %916
      %918 = vrot.lane.b32.xlu0 %v904, 126
      %v919 = vpop.permute.xlu0 %918
      %920 = vrot.lane.b32.xlu0 %v905, 126
      %v921 = vpop.permute.xlu0 %920
      %922 = vrot.lane.b32.xlu0 %v906, 126
      %v923 = vpop.permute.xlu0 %922
      %924 = vrot.lane.b32.xlu0 %v907, 126
      %v925 = vpop.permute.xlu0 %924
      %vm926 = vcmask 1031168
      %v927 = vsel %vm926, %v909, %v911
      %v928 = vsel %vm926, %v911, %v913
      %v929 = vsel %vm926, %v913, %v915
      %v930 = vsel %vm926, %v915, %v917
      %v931 = vsel %vm926, %v917, %v919
      %v932 = vsel %vm926, %v919, %v921
      %v933 = vsel %vm926, %v921, %v923
      %v934 = vsel %vm926, %v923, %v925
      %v944 = vrot.slane %v717, 2
      %v945 = vrot.slane %v718, 2
      %v946 = vrot.slane %v719, 2
      %v947 = vrot.slane %v720, 2
      %v948 = vrot.slane %v721, 2
      %v949 = vrot.slane %v722, 2
      %v950 = vrot.slane %v723, 2
      %v951 = vrot.slane %v724, 2
      %v952 = vrot.slane %v725, 2
      %953 = vrot.lane.b32.xlu0 %v944, 96
      %v954 = vpop.permute.xlu0 %953
      %955 = vrot.lane.b32.xlu0 %v945, 96
      %v956 = vpop.permute.xlu0 %955
      %957 = vrot.lane.b32.xlu0 %v946, 96
      %v958 = vpop.permute.xlu0 %957
      %959 = vrot.lane.b32.xlu0 %v947, 96
      %v960 = vpop.permute.xlu0 %959
      %961 = vrot.lane.b32.xlu0 %v948, 96
      %v962 = vpop.permute.xlu0 %961
      %963 = vrot.lane.b32.xlu0 %v949, 96
      %v964 = vpop.permute.xlu0 %963
      %965 = vrot.lane.b32.xlu0 %v950, 96
      %v966 = vpop.permute.xlu0 %965
      %967 = vrot.lane.b32.xlu0 %v951, 96
      %v968 = vpop.permute.xlu0 %967
      %969 = vrot.lane.b32.xlu0 %v952, 96
      %v970 = vpop.permute.xlu0 %969
      %vm971 = vcmask 785408
      %v972 = vsel %vm971, %v954, %v956
      %v973 = vsel %vm971, %v956, %v958
      %v974 = vsel %vm971, %v958, %v960
      %v975 = vsel %vm971, %v960, %v962
      %v976 = vsel %vm971, %v962, %v964
      %v977 = vsel %vm971, %v964, %v966
      %v978 = vsel %vm971, %v966, %v968
      %v979 = vsel %vm971, %v968, %v970
      %980 = vrot.lane.b32.xlu0 %v509, 95
      %v981 = vpop.permute.xlu0 %980
      %982 = vrot.lane.b32.xlu0 %v492, 95
      %v983 = vpop.permute.xlu0 %982
      %984 = vrot.lane.b32.xlu0 %v493, 95
      %v985 = vpop.permute.xlu0 %984
      %986 = vrot.lane.b32.xlu0 %v494, 95
      %v987 = vpop.permute.xlu0 %986
      %988 = vrot.lane.b32.xlu0 %v495, 95
      %v989 = vpop.permute.xlu0 %988
      %990 = vrot.lane.b32.xlu0 %v496, 95
      %v991 = vpop.permute.xlu0 %990
      %992 = vrot.lane.b32.xlu0 %v497, 95
      %v993 = vpop.permute.xlu0 %992
      %994 = vrot.lane.b32.xlu0 %v498, 95
      %v995 = vpop.permute.xlu0 %994
      %996 = vrot.lane.b32.xlu0 %v512, 95
      %v997 = vpop.permute.xlu0 %996
      %vm998 = vcmask 777216
      %v999 = vsel %vm998, %v981, %v983
      %v1000 = vsel %vm998, %v983, %v985
      %v1001 = vsel %vm998, %v985, %v987
      %v1002 = vsel %vm998, %v987, %v989
      %v1003 = vsel %vm998, %v989, %v991
      %v1004 = vsel %vm998, %v991, %v993
      %v1005 = vsel %vm998, %v993, %v995
      %v1006 = vsel %vm998, %v995, %v997
      %v1016 = vrot.slane %v759, 6
      %v1017 = vrot.slane %v760, 6
      %v1018 = vrot.slane %v761, 6
      %v1019 = vrot.slane %v762, 6
      %v1020 = vrot.slane %v763, 6
      %v1021 = vrot.slane %v764, 6
      %v1022 = vrot.slane %v765, 6
      %v1023 = vrot.slane %v766, 6
      %v1024 = vrot.slane %v767, 6
      %1025 = vrot.lane.b32.xlu0 %v1016, 94
      %v1026 = vpop.permute.xlu0 %1025
      %1027 = vrot.lane.b32.xlu0 %v1017, 94
      %v1028 = vpop.permute.xlu0 %1027
      %1029 = vrot.lane.b32.xlu0 %v1018, 94
      %v1030 = vpop.permute.xlu0 %1029
      %1031 = vrot.lane.b32.xlu0 %v1019, 94
      %v1032 = vpop.permute.xlu0 %1031
      %1033 = vrot.lane.b32.xlu0 %v1020, 94
      %v1034 = vpop.permute.xlu0 %1033
      %1035 = vrot.lane.b32.xlu0 %v1021, 94
      %v1036 = vpop.permute.xlu0 %1035
      %1037 = vrot.lane.b32.xlu0 %v1022, 94
      %v1038 = vpop.permute.xlu0 %1037
      %1039 = vrot.lane.b32.xlu0 %v1023, 94
      %v1040 = vpop.permute.xlu0 %1039
      %1041 = vrot.lane.b32.xlu0 %v1024, 94
      %v1042 = vpop.permute.xlu0 %1041
      %vm1043 = vcmask 769024
      %v1044 = vsel %vm1043, %v1026, %v1028
      %v1045 = vsel %vm1043, %v1028, %v1030
      %v1046 = vsel %vm1043, %v1030, %v1032
      %v1047 = vsel %vm1043, %v1032, %v1034
      %v1048 = vsel %vm1043, %v1034, %v1036
      %v1049 = vsel %vm1043, %v1036, %v1038
      %v1050 = vsel %vm1043, %v1038, %v1040
      %v1051 = vsel %vm1043, %v1040, %v1042
      %v1061 = vrot.slane %v801, 4
      %v1062 = vrot.slane %v802, 4
      %v1063 = vrot.slane %v803, 4
      %v1064 = vrot.slane %v804, 4
      %v1065 = vrot.slane %v805, 4
      %v1066 = vrot.slane %v806, 4
      %v1067 = vrot.slane %v807, 4
      %v1068 = vrot.slane %v808, 4
      %v1069 = vrot.slane %v809, 4
      %1070 = vrot.lane.b32.xlu0 %v1061, 64
      %v1071 = vpop.permute.xlu0 %1070
      %1072 = vrot.lane.b32.xlu0 %v1062, 64
      %v1073 = vpop.permute.xlu0 %1072
      %1074 = vrot.lane.b32.xlu0 %v1063, 64
      %v1075 = vpop.permute.xlu0 %1074
      %1076 = vrot.lane.b32.xlu0 %v1064, 64
      %v1077 = vpop.permute.xlu0 %1076
      %1078 = vrot.lane.b32.xlu0 %v1065, 64
      %v1079 = vpop.permute.xlu0 %1078
      %1080 = vrot.lane.b32.xlu0 %v1066, 64
      %v1081 = vpop.permute.xlu0 %1080
      %1082 = vrot.lane.b32.xlu0 %v1067, 64
      %v1083 = vpop.permute.xlu0 %1082
      %1084 = vrot.lane.b32.xlu0 %v1068, 64
      %v1085 = vpop.permute.xlu0 %1084
      %1086 = vrot.lane.b32.xlu0 %v1069, 64
      %v1087 = vpop.permute.xlu0 %1086
      %v1088 = vsel %vm784, %v1071, %v1073
      %v1089 = vsel %vm784, %v1073, %v1075
      %v1090 = vsel %vm784, %v1075, %v1077
      %v1091 = vsel %vm784, %v1077, %v1079
      %v1092 = vsel %vm784, %v1079, %v1081
      %v1093 = vsel %vm784, %v1081, %v1083
      %v1094 = vsel %vm784, %v1083, %v1085
      %v1095 = vsel %vm784, %v1085, %v1087
      %v1096 = vrot.slane %v509, 2
      %v1097 = vrot.slane %v492, 2
      %v1098 = vrot.slane %v493, 2
      %v1099 = vrot.slane %v494, 2
      %v1100 = vrot.slane %v495, 2
      %v1101 = vrot.slane %v496, 2
      %v1102 = vrot.slane %v497, 2
      %v1103 = vrot.slane %v498, 2
      %v1104 = vrot.slane %v512, 2
      %1105 = vrot.lane.b32.xlu0 %v1096, 63
      %v1106 = vpop.permute.xlu0 %1105
      %1107 = vrot.lane.b32.xlu0 %v1097, 63
      %v1108 = vpop.permute.xlu0 %1107
      %1109 = vrot.lane.b32.xlu0 %v1098, 63
      %v1110 = vpop.permute.xlu0 %1109
      %1111 = vrot.lane.b32.xlu0 %v1099, 63
      %v1112 = vpop.permute.xlu0 %1111
      %1113 = vrot.lane.b32.xlu0 %v1100, 63
      %v1114 = vpop.permute.xlu0 %1113
      %1115 = vrot.lane.b32.xlu0 %v1101, 63
      %v1116 = vpop.permute.xlu0 %1115
      %1117 = vrot.lane.b32.xlu0 %v1102, 63
      %v1118 = vpop.permute.xlu0 %1117
      %1119 = vrot.lane.b32.xlu0 %v1103, 63
      %v1120 = vpop.permute.xlu0 %1119
      %1121 = vrot.lane.b32.xlu0 %v1104, 63
      %v1122 = vpop.permute.xlu0 %1121
      %vm1123 = vcmask 515072
      %v1124 = vsel %vm1123, %v1106, %v1108
      %v1125 = vsel %vm1123, %v1108, %v1110
      %v1126 = vsel %vm1123, %v1110, %v1112
      %v1127 = vsel %vm1123, %v1112, %v1114
      %v1128 = vsel %vm1123, %v1114, %v1116
      %v1129 = vsel %vm1123, %v1116, %v1118
      %v1130 = vsel %vm1123, %v1118, %v1120
      %v1131 = vsel %vm1123, %v1120, %v1122
      %1141 = vrot.lane.b32.xlu0 %v843, 62
      %v1142 = vpop.permute.xlu0 %1141
      %1143 = vrot.lane.b32.xlu0 %v844, 62
      %v1144 = vpop.permute.xlu0 %1143
      %1145 = vrot.lane.b32.xlu0 %v845, 62
      %v1146 = vpop.permute.xlu0 %1145
      %1147 = vrot.lane.b32.xlu0 %v846, 62
      %v1148 = vpop.permute.xlu0 %1147
      %1149 = vrot.lane.b32.xlu0 %v847, 62
      %v1150 = vpop.permute.xlu0 %1149
      %1151 = vrot.lane.b32.xlu0 %v848, 62
      %v1152 = vpop.permute.xlu0 %1151
      %1153 = vrot.lane.b32.xlu0 %v849, 62
      %v1154 = vpop.permute.xlu0 %1153
      %1155 = vrot.lane.b32.xlu0 %v850, 62
      %v1156 = vpop.permute.xlu0 %1155
      %1157 = vrot.lane.b32.xlu0 %v851, 62
      %v1158 = vpop.permute.xlu0 %1157
      %vm1159 = vcmask 506880
      %v1160 = vsel %vm1159, %v1142, %v1144
      %v1161 = vsel %vm1159, %v1144, %v1146
      %v1162 = vsel %vm1159, %v1146, %v1148
      %v1163 = vsel %vm1159, %v1148, %v1150
      %v1164 = vsel %vm1159, %v1150, %v1152
      %v1165 = vsel %vm1159, %v1152, %v1154
      %v1166 = vsel %vm1159, %v1154, %v1156
      %v1167 = vsel %vm1159, %v1156, %v1158
      %vm1168 = vcmask 1041408
      %v1171 = vsel %vm1168, %v578, %v882
      %v1174 = vsel %vm1168, %v579, %v883
      %v1177 = vsel %vm1168, %v580, %v884
      %v1180 = vsel %vm1168, %v581, %v885
      %v1183 = vsel %vm1168, %v582, %v886
      %v1186 = vsel %vm1168, %v583, %v887
      %v1189 = vsel %vm1168, %v584, %v888
      %v1192 = vsel %vm1168, %v585, %v889
      %vm1193 = vcmask 1043456
      %v1195 = vsel %vm1193, %v1171, %v927
      %v1197 = vsel %vm1193, %v1174, %v928
      %v1199 = vsel %vm1193, %v1177, %v929
      %v1201 = vsel %vm1193, %v1180, %v930
      %v1203 = vsel %vm1193, %v1183, %v931
      %v1205 = vsel %vm1193, %v1186, %v932
      %v1207 = vsel %vm1193, %v1189, %v933
      %v1209 = vsel %vm1193, %v1192, %v934
      %vm1210 = vcmask 1045504
      %v1212 = vsel %vm1210, %v1195, %v972
      %v1215 = vsel %vm1210, %v1197, %v973
      %v1218 = vsel %vm1210, %v1199, %v974
      %v1221 = vsel %vm1210, %v1201, %v975
      %v1224 = vsel %vm1210, %v1203, %v976
      %v1227 = vsel %vm1210, %v1205, %v977
      %v1230 = vsel %vm1210, %v1207, %v978
      %v1233 = vsel %vm1210, %v1209, %v979
      %v1237 = vsel %vm1168, %v999, %v1044
      %v1240 = vsel %vm1168, %v1000, %v1045
      %v1243 = vsel %vm1168, %v1001, %v1046
      %v1246 = vsel %vm1168, %v1002, %v1047
      %v1249 = vsel %vm1168, %v1003, %v1048
      %v1252 = vsel %vm1168, %v1004, %v1049
      %v1255 = vsel %vm1168, %v1005, %v1050
      %v1258 = vsel %vm1168, %v1006, %v1051
      %v1260 = vsel %vm1193, %v1237, %v1088
      %v1262 = vsel %vm1193, %v1240, %v1089
      %v1264 = vsel %vm1193, %v1243, %v1090
      %v1266 = vsel %vm1193, %v1246, %v1091
      %v1268 = vsel %vm1193, %v1249, %v1092
      %v1270 = vsel %vm1193, %v1252, %v1093
      %v1272 = vsel %vm1193, %v1255, %v1094
      %v1274 = vsel %vm1193, %v1258, %v1095
      %v1276 = vsel %vm1210, %v1260, %v1124
      %v1279 = vsel %vm1210, %v1262, %v1125
      %v1282 = vsel %vm1210, %v1264, %v1126
      %v1285 = vsel %vm1210, %v1266, %v1127
      %v1288 = vsel %vm1210, %v1268, %v1128
      %v1291 = vsel %vm1210, %v1270, %v1129
      %v1294 = vsel %vm1210, %v1272, %v1130
      %v1297 = vsel %vm1210, %v1274, %v1131
      %v1299 = vld [vmem:[%s304] sm:$0xff]
      %v1300 = vld [vmem:[%s304 + $0x8] sm:$0xff]
      %v1303 = vcombine.high %v1299, %v1299
      %v1305 = vunpack.c.l.s4 1983009808
      %v1306 = vunpack.c.0.s8 %v1305
      %v1307 = vlaneseq
      %v1308 = vshrl.u32 %v1307, 7
      %v1309 = vsub.s32 %v1306, %v1308
      %v1310 = vrot.slane %v1299, %v1309
      %v1312 = vunpack.c.l.s4 1983009808
      %v1313 = vunpack.c.0.s8 %v1312
      %v1314 = vlaneseq
      %v1315 = vshrl.u32 %v1314, 7
      %v1316 = vsub.s32 %v1313, %v1315
      %v1317 = vrot.slane %v1303, %v1316
      %v1318 = vcombine.high %v1310, %v1310
      %v1319 = vcombine.high %v1317, %v1317
      %v1320 = vcombine.high %v1300, %v1300
      %v1322 = vunpack.c.l.s4 1983009808
      %v1323 = vunpack.c.0.s8 %v1322
      %v1324 = vlaneseq
      %v1325 = vshrl.u32 %v1324, 7
      %v1326 = vsub.s32 %v1323, %v1325
      %v1327 = vrot.slane %v1300, %v1326
      %v1329 = vunpack.c.l.s4 1983009808
      %v1330 = vunpack.c.0.s8 %v1329
      %v1331 = vlaneseq
      %v1332 = vshrl.u32 %v1331, 7
      %v1333 = vsub.s32 %v1330, %v1332
      %v1334 = vrot.slane %v1320, %v1333
      %v1335 = vcombine.high %v1327, %v1327
      %v1336 = vcombine.high %v1334, %v1334
      %1337 = vrot.lane.b32.xlu0 %v1310, 33
      %v1338 = vpop.permute.xlu0 %1337
      %1339 = vrot.lane.b32.xlu0 %v1318, 33
      %v1340 = vpop.permute.xlu0 %1339
      %1341 = vrot.lane.b32.xlu0 %v1317, 33
      %v1342 = vpop.permute.xlu0 %1341
      %1343 = vrot.lane.b32.xlu0 %v1319, 33
      %v1344 = vpop.permute.xlu0 %1343
      %1345 = vrot.lane.b32.xlu0 %v1327, 33
      %v1346 = vpop.permute.xlu0 %1345
      %1347 = vrot.lane.b32.xlu0 %v1335, 33
      %v1348 = vpop.permute.xlu0 %1347
      %1349 = vrot.lane.b32.xlu0 %v1334, 33
      %v1350 = vpop.permute.xlu0 %1349
      %1351 = vrot.lane.b32.xlu0 %v1336, 33
      %v1352 = vpop.permute.xlu0 %1351
      %v1353 = vsel %vm491, %v1338, %v1340
      %v1354 = vsel %vm491, %v1340, %v1342
      %v1355 = vsel %vm491, %v1342, %v1344
      %v1356 = vsel %vm491, %v1344, %v1346
      %v1357 = vsel %vm491, %v1346, %v1348
      %v1358 = vsel %vm491, %v1348, %v1350
      %v1359 = vsel %vm491, %v1350, %v1352
      %v1368 = vsel %vm506, 0, %v1338
      %v1371 = vsel %vm506, %v1352, 0
      %v1373 = vsel %vm570, %v1368, 0
      %v1374 = vsel %vm571, %v1353, 0
      %v1375 = vsel %vm572, %v1354, 0
      %v1376 = vsel %vm573, %v1355, 0
      %v1377 = vsel %vm574, %v1356, 0
      %v1378 = vsel %vm575, %v1357, 0
      %v1379 = vsel %vm576, %v1358, 0
      %v1380 = vsel %vm577, %v1359, 0
      %v1381 = vsel %vm666, %v1368, 0
      %v1382 = vsel %vm667, %v1353, 0
      %v1383 = vsel %vm668, %v1354, 0
      %v1384 = vsel %vm669, %v1355, 0
      %v1385 = vsel %vm670, %v1356, 0
      %v1386 = vsel %vm671, %v1357, 0
      %v1387 = vsel %vm672, %v1358, 0
      %v1388 = vsel %vm673, %v1359, 0
      %v1389 = vsel %vm674, %v1371, 0
      %v1390 = vsel %vm708, %v1368, 0
      %v1391 = vsel %vm709, %v1353, 0
      %v1392 = vsel %vm710, %v1354, 0
      %v1393 = vsel %vm711, %v1355, 0
      %v1394 = vsel %vm712, %v1356, 0
      %v1395 = vsel %vm713, %v1357, 0
      %v1396 = vsel %vm714, %v1358, 0
      %v1397 = vsel %vm715, %v1359, 0
      %v1398 = vsel %vm716, %v1371, 0
      %v1399 = vsel %vm750, %v1368, 0
      %v1400 = vsel %vm751, %v1353, 0
      %v1401 = vsel %vm752, %v1354, 0
      %v1402 = vsel %vm753, %v1355, 0
      %v1403 = vsel %vm754, %v1356, 0
      %v1404 = vsel %vm755, %v1357, 0
      %v1405 = vsel %vm756, %v1358, 0
      %v1406 = vsel %vm757, %v1359, 0
      %v1407 = vsel %vm758, %v1371, 0
      %v1408 = vsel %vm792, %v1368, 0
      %v1409 = vsel %vm793, %v1353, 0
      %v1410 = vsel %vm794, %v1354, 0
      %v1411 = vsel %vm795, %v1355, 0
      %v1412 = vsel %vm796, %v1356, 0
      %v1413 = vsel %vm797, %v1357, 0
      %v1414 = vsel %vm798, %v1358, 0
      %v1415 = vsel %vm799, %v1359, 0
      %v1416 = vsel %vm800, %v1371, 0
      %v1417 = vsel %vm834, %v1368, 0
      %v1418 = vsel %vm835, %v1353, 0
      %v1419 = vsel %vm836, %v1354, 0
      %v1420 = vsel %vm837, %v1355, 0
      %v1421 = vsel %vm838, %v1356, 0
      %v1422 = vsel %vm839, %v1357, 0
      %v1423 = vsel %vm840, %v1358, 0
      %v1424 = vsel %vm841, %v1359, 0
      %v1425 = vsel %vm842, %v1371, 0
      %v1428 = vrot.slane %v1368, 6
      %v1429 = vrot.slane %v1353, 6
      %v1430 = vrot.slane %v1354, 6
      %v1431 = vrot.slane %v1355, 6
      %v1432 = vrot.slane %v1356, 6
      %v1433 = vrot.slane %v1357, 6
      %v1434 = vrot.slane %v1358, 6
      %v1435 = vrot.slane %v1359, 6
      %v1436 = vrot.slane %v1371, 6
      %1437 = vrot.lane.b32.xlu0 %v1428, 127
      %v1438 = vpop.permute.xlu0 %1437
      %1439 = vrot.lane.b32.xlu0 %v1429, 127
      %v1440 = vpop.permute.xlu0 %1439
      %1441 = vrot.lane.b32.xlu0 %v1430, 127
      %v1442 = vpop.permute.xlu0 %1441
      %1443 = vrot.lane.b32.xlu0 %v1431, 127
      %v1444 = vpop.permute.xlu0 %1443
      %1445 = vrot.lane.b32.xlu0 %v1432, 127
      %v1446 = vpop.permute.xlu0 %1445
      %1447 = vrot.lane.b32.xlu0 %v1433, 127
      %v1448 = vpop.permute.xlu0 %1447
      %1449 = vrot.lane.b32.xlu0 %v1434, 127
      %v1450 = vpop.permute.xlu0 %1449
      %1451 = vrot.lane.b32.xlu0 %v1435, 127
      %v1452 = vpop.permute.xlu0 %1451
      %1453 = vrot.lane.b32.xlu0 %v1436, 127
      %v1454 = vpop.permute.xlu0 %1453
      %v1455 = vsel %vm881, %v1438, %v1440
      %v1456 = vsel %vm881, %v1440, %v1442
      %v1457 = vsel %vm881, %v1442, %v1444
      %v1458 = vsel %vm881, %v1444, %v1446
      %v1459 = vsel %vm881, %v1446, %v1448
      %v1460 = vsel %vm881, %v1448, %v1450
      %v1461 = vsel %vm881, %v1450, %v1452
      %v1462 = vsel %vm881, %v1452, %v1454
      %v1472 = vrot.slane %v1381, 4
      %v1473 = vrot.slane %v1382, 4
      %v1474 = vrot.slane %v1383, 4
      %v1475 = vrot.slane %v1384, 4
      %v1476 = vrot.slane %v1385, 4
      %v1477 = vrot.slane %v1386, 4
      %v1478 = vrot.slane %v1387, 4
      %v1479 = vrot.slane %v1388, 4
      %v1480 = vrot.slane %v1389, 4
      %1481 = vrot.lane.b32.xlu0 %v1472, 126
      %v1482 = vpop.permute.xlu0 %1481
      %1483 = vrot.lane.b32.xlu0 %v1473, 126
      %v1484 = vpop.permute.xlu0 %1483
      %1485 = vrot.lane.b32.xlu0 %v1474, 126
      %v1486 = vpop.permute.xlu0 %1485
      %1487 = vrot.lane.b32.xlu0 %v1475, 126
      %v1488 = vpop.permute.xlu0 %1487
      %1489 = vrot.lane.b32.xlu0 %v1476, 126
      %v1490 = vpop.permute.xlu0 %1489
      %1491 = vrot.lane.b32.xlu0 %v1477, 126
      %v1492 = vpop.permute.xlu0 %1491
      %1493 = vrot.lane.b32.xlu0 %v1478, 126
      %v1494 = vpop.permute.xlu0 %1493
      %1495 = vrot.lane.b32.xlu0 %v1479, 126
      %v1496 = vpop.permute.xlu0 %1495
      %1497 = vrot.lane.b32.xlu0 %v1480, 126
      %v1498 = vpop.permute.xlu0 %1497
      %v1499 = vsel %vm926, %v1482, %v1484
      %v1500 = vsel %vm926, %v1484, %v1486
      %v1501 = vsel %vm926, %v1486, %v1488
      %v1502 = vsel %vm926, %v1488, %v1490
      %v1503 = vsel %vm926, %v1490, %v1492
      %v1504 = vsel %vm926, %v1492, %v1494
      %v1505 = vsel %vm926, %v1494, %v1496
      %v1506 = vsel %vm926, %v1496, %v1498
      %v1516 = vrot.slane %v1390, 2
      %v1517 = vrot.slane %v1391, 2
      %v1518 = vrot.slane %v1392, 2
      %v1519 = vrot.slane %v1393, 2
      %v1520 = vrot.slane %v1394, 2
      %v1521 = vrot.slane %v1395, 2
      %v1522 = vrot.slane %v1396, 2
      %v1523 = vrot.slane %v1397, 2
      %v1524 = vrot.slane %v1398, 2
      %1525 = vrot.lane.b32.xlu0 %v1516, 96
      %v1526 = vpop.permute.xlu0 %1525
      %1527 = vrot.lane.b32.xlu0 %v1517, 96
      %v1528 = vpop.permute.xlu0 %1527
      %1529 = vrot.lane.b32.xlu0 %v1518, 96
      %v1530 = vpop.permute.xlu0 %1529
      %1531 = vrot.lane.b32.xlu0 %v1519, 96
      %v1532 = vpop.permute.xlu0 %1531
      %1533 = vrot.lane.b32.xlu0 %v1520, 96
      %v1534 = vpop.permute.xlu0 %1533
      %1535 = vrot.lane.b32.xlu0 %v1521, 96
      %v1536 = vpop.permute.xlu0 %1535
      %1537 = vrot.lane.b32.xlu0 %v1522, 96
      %v1538 = vpop.permute.xlu0 %1537
      %1539 = vrot.lane.b32.xlu0 %v1523, 96
      %v1540 = vpop.permute.xlu0 %1539
      %1541 = vrot.lane.b32.xlu0 %v1524, 96
      %v1542 = vpop.permute.xlu0 %1541
      %v1543 = vsel %vm971, %v1526, %v1528
      %v1544 = vsel %vm971, %v1528, %v1530
      %v1545 = vsel %vm971, %v1530, %v1532
      %v1546 = vsel %vm971, %v1532, %v1534
      %v1547 = vsel %vm971, %v1534, %v1536
      %v1548 = vsel %vm971, %v1536, %v1538
      %v1549 = vsel %vm971, %v1538, %v1540
      %v1550 = vsel %vm971, %v1540, %v1542
      %1551 = vrot.lane.b32.xlu0 %v1368, 95
      %v1552 = vpop.permute.xlu0 %1551
      %1553 = vrot.lane.b32.xlu0 %v1353, 95
      %v1554 = vpop.permute.xlu0 %1553
      %1555 = vrot.lane.b32.xlu0 %v1354, 95
      %v1556 = vpop.permute.xlu0 %1555
      %1557 = vrot.lane.b32.xlu0 %v1355, 95
      %v1558 = vpop.permute.xlu0 %1557
      %1559 = vrot.lane.b32.xlu0 %v1356, 95
      %v1560 = vpop.permute.xlu0 %1559
      %1561 = vrot.lane.b32.xlu0 %v1357, 95
      %v1562 = vpop.permute.xlu0 %1561
      %1563 = vrot.lane.b32.xlu0 %v1358, 95
      %v1564 = vpop.permute.xlu0 %1563
      %1565 = vrot.lane.b32.xlu0 %v1359, 95
      %v1566 = vpop.permute.xlu0 %1565
      %1567 = vrot.lane.b32.xlu0 %v1371, 95
      %v1568 = vpop.permute.xlu0 %1567
      %v1569 = vsel %vm998, %v1552, %v1554
      %v1570 = vsel %vm998, %v1554, %v1556
      %v1571 = vsel %vm998, %v1556, %v1558
      %v1572 = vsel %vm998, %v1558, %v1560
      %v1573 = vsel %vm998, %v1560, %v1562
      %v1574 = vsel %vm998, %v1562, %v1564
      %v1575 = vsel %vm998, %v1564, %v1566
      %v1576 = vsel %vm998, %v1566, %v1568
      %v1586 = vrot.slane %v1399, 6
      %v1587 = vrot.slane %v1400, 6
      %v1588 = vrot.slane %v1401, 6
      %v1589 = vrot.slane %v1402, 6
      %v1590 = vrot.slane %v1403, 6
      %v1591 = vrot.slane %v1404, 6
      %v1592 = vrot.slane %v1405, 6
      %v1593 = vrot.slane %v1406, 6
      %v1594 = vrot.slane %v1407, 6
      %1595 = vrot.lane.b32.xlu0 %v1586, 94
      %v1596 = vpop.permute.xlu0 %1595
      %1597 = vrot.lane.b32.xlu0 %v1587, 94
      %v1598 = vpop.permute.xlu0 %1597
      %1599 = vrot.lane.b32.xlu0 %v1588, 94
      %v1600 = vpop.permute.xlu0 %1599
      %1601 = vrot.lane.b32.xlu0 %v1589, 94
      %v1602 = vpop.permute.xlu0 %1601
      %1603 = vrot.lane.b32.xlu0 %v1590, 94
      %v1604 = vpop.permute.xlu0 %1603
      %1605 = vrot.lane.b32.xlu0 %v1591, 94
      %v1606 = vpop.permute.xlu0 %1605
      %1607 = vrot.lane.b32.xlu0 %v1592, 94
      %v1608 = vpop.permute.xlu0 %1607
      %1609 = vrot.lane.b32.xlu0 %v1593, 94
      %v1610 = vpop.permute.xlu0 %1609
      %1611 = vrot.lane.b32.xlu0 %v1594, 94
      %v1612 = vpop.permute.xlu0 %1611
      %v1613 = vsel %vm1043, %v1596, %v1598
      %v1614 = vsel %vm1043, %v1598, %v1600
      %v1615 = vsel %vm1043, %v1600, %v1602
      %v1616 = vsel %vm1043, %v1602, %v1604
      %v1617 = vsel %vm1043, %v1604, %v1606
      %v1618 = vsel %vm1043, %v1606, %v1608
      %v1619 = vsel %vm1043, %v1608, %v1610
      %v1620 = vsel %vm1043, %v1610, %v1612
      %v1630 = vrot.slane %v1408, 4
      %v1631 = vrot.slane %v1409, 4
      %v1632 = vrot.slane %v1410, 4
      %v1633 = vrot.slane %v1411, 4
      %v1634 = vrot.slane %v1412, 4
      %v1635 = vrot.slane %v1413, 4
      %v1636 = vrot.slane %v1414, 4
      %v1637 = vrot.slane %v1415, 4
      %v1638 = vrot.slane %v1416, 4
      %1639 = vrot.lane.b32.xlu0 %v1630, 64
      %v1640 = vpop.permute.xlu0 %1639
      %1641 = vrot.lane.b32.xlu0 %v1631, 64
      %v1642 = vpop.permute.xlu0 %1641
      %1643 = vrot.lane.b32.xlu0 %v1632, 64
      %v1644 = vpop.permute.xlu0 %1643
      %1645 = vrot.lane.b32.xlu0 %v1633, 64
      %v1646 = vpop.permute.xlu0 %1645
      %1647 = vrot.lane.b32.xlu0 %v1634, 64
      %v1648 = vpop.permute.xlu0 %1647
      %1649 = vrot.lane.b32.xlu0 %v1635, 64
      %v1650 = vpop.permute.xlu0 %1649
      %1651 = vrot.lane.b32.xlu0 %v1636, 64
      %v1652 = vpop.permute.xlu0 %1651
      %1653 = vrot.lane.b32.xlu0 %v1637, 64
      %v1654 = vpop.permute.xlu0 %1653
      %1655 = vrot.lane.b32.xlu0 %v1638, 64
      %v1656 = vpop.permute.xlu0 %1655
      %v1657 = vsel %vm784, %v1640, %v1642
      %v1658 = vsel %vm784, %v1642, %v1644
      %v1659 = vsel %vm784, %v1644, %v1646
      %v1660 = vsel %vm784, %v1646, %v1648
      %v1661 = vsel %vm784, %v1648, %v1650
      %v1662 = vsel %vm784, %v1650, %v1652
      %v1663 = vsel %vm784, %v1652, %v1654
      %v1664 = vsel %vm784, %v1654, %v1656
      %v1665 = vrot.slane %v1368, 2
      %v1666 = vrot.slane %v1353, 2
      %v1667 = vrot.slane %v1354, 2
      %v1668 = vrot.slane %v1355, 2
      %v1669 = vrot.slane %v1356, 2
      %v1670 = vrot.slane %v1357, 2
      %v1671 = vrot.slane %v1358, 2
      %v1672 = vrot.slane %v1359, 2
      %v1673 = vrot.slane %v1371, 2
      %1674 = vrot.lane.b32.xlu0 %v1665, 63
      %v1675 = vpop.permute.xlu0 %1674
      %1676 = vrot.lane.b32.xlu0 %v1666, 63
      %v1677 = vpop.permute.xlu0 %1676
      %1678 = vrot.lane.b32.xlu0 %v1667, 63
      %v1679 = vpop.permute.xlu0 %1678
      %1680 = vrot.lane.b32.xlu0 %v1668, 63
      %v1681 = vpop.permute.xlu0 %1680
      %1682 = vrot.lane.b32.xlu0 %v1669, 63
      %v1683 = vpop.permute.xlu0 %1682
      %1684 = vrot.lane.b32.xlu0 %v1670, 63
      %v1685 = vpop.permute.xlu0 %1684
      %1686 = vrot.lane.b32.xlu0 %v1671, 63
      %v1687 = vpop.permute.xlu0 %1686
      %1688 = vrot.lane.b32.xlu0 %v1672, 63
      %v1689 = vpop.permute.xlu0 %1688
      %1690 = vrot.lane.b32.xlu0 %v1673, 63
      %v1691 = vpop.permute.xlu0 %1690
      %v1692 = vsel %vm1123, %v1675, %v1677
      %v1693 = vsel %vm1123, %v1677, %v1679
      %v1694 = vsel %vm1123, %v1679, %v1681
      %v1695 = vsel %vm1123, %v1681, %v1683
      %v1696 = vsel %vm1123, %v1683, %v1685
      %v1697 = vsel %vm1123, %v1685, %v1687
      %v1698 = vsel %vm1123, %v1687, %v1689
      %v1699 = vsel %vm1123, %v1689, %v1691
      %1709 = vrot.lane.b32.xlu0 %v1417, 62
      %v1710 = vpop.permute.xlu0 %1709
      %1711 = vrot.lane.b32.xlu0 %v1418, 62
      %v1712 = vpop.permute.xlu0 %1711
      %1713 = vrot.lane.b32.xlu0 %v1419, 62
      %v1714 = vpop.permute.xlu0 %1713
      %1715 = vrot.lane.b32.xlu0 %v1420, 62
      %v1716 = vpop.permute.xlu0 %1715
      %1717 = vrot.lane.b32.xlu0 %v1421, 62
      %v1718 = vpop.permute.xlu0 %1717
      %1719 = vrot.lane.b32.xlu0 %v1422, 62
      %v1720 = vpop.permute.xlu0 %1719
      %1721 = vrot.lane.b32.xlu0 %v1423, 62
      %v1722 = vpop.permute.xlu0 %1721
      %1723 = vrot.lane.b32.xlu0 %v1424, 62
      %v1724 = vpop.permute.xlu0 %1723
      %1725 = vrot.lane.b32.xlu0 %v1425, 62
      %v1726 = vpop.permute.xlu0 %1725
      %v1727 = vsel %vm1159, %v1710, %v1712
      %v1728 = vsel %vm1159, %v1712, %v1714
      %v1729 = vsel %vm1159, %v1714, %v1716
      %v1730 = vsel %vm1159, %v1716, %v1718
      %v1731 = vsel %vm1159, %v1718, %v1720
      %v1732 = vsel %vm1159, %v1720, %v1722
      %v1733 = vsel %vm1159, %v1722, %v1724
      %v1734 = vsel %vm1159, %v1724, %v1726
      %v1737 = vsel %vm1168, %v1373, %v1455
      %v1740 = vsel %vm1168, %v1374, %v1456
      %v1743 = vsel %vm1168, %v1375, %v1457
      %v1746 = vsel %vm1168, %v1376, %v1458
      %v1749 = vsel %vm1168, %v1377, %v1459
      %v1752 = vsel %vm1168, %v1378, %v1460
      %v1755 = vsel %vm1168, %v1379, %v1461
      %v1758 = vsel %vm1168, %v1380, %v1462
      %v1760 = vsel %vm1193, %v1737, %v1499
      %v1762 = vsel %vm1193, %v1740, %v1500
      %v1764 = vsel %vm1193, %v1743, %v1501
      %v1766 = vsel %vm1193, %v1746, %v1502
      %v1768 = vsel %vm1193, %v1749, %v1503
      %v1770 = vsel %vm1193, %v1752, %v1504
      %v1772 = vsel %vm1193, %v1755, %v1505
      %v1774 = vsel %vm1193, %v1758, %v1506
      %v1776 = vsel %vm1210, %v1760, %v1543
      %v1778 = vsel %vm1210, %v1762, %v1544
      %v1780 = vsel %vm1210, %v1764, %v1545
      %v1782 = vsel %vm1210, %v1766, %v1546
      %v1784 = vsel %vm1210, %v1768, %v1547
      %v1786 = vsel %vm1210, %v1770, %v1548
      %v1788 = vsel %vm1210, %v1772, %v1549
      %v1790 = vsel %vm1210, %v1774, %v1550
      %v1793 = vsel %vm1168, %v1569, %v1613
      %v1796 = vsel %vm1168, %v1570, %v1614
      %v1799 = vsel %vm1168, %v1571, %v1615
      %v1802 = vsel %vm1168, %v1572, %v1616
      %v1805 = vsel %vm1168, %v1573, %v1617
      %v1808 = vsel %vm1168, %v1574, %v1618
      %v1811 = vsel %vm1168, %v1575, %v1619
      %v1814 = vsel %vm1168, %v1576, %v1620
      %v1816 = vsel %vm1193, %v1793, %v1657
      %v1818 = vsel %vm1193, %v1796, %v1658
      %v1820 = vsel %vm1193, %v1799, %v1659
      %v1822 = vsel %vm1193, %v1802, %v1660
      %v1824 = vsel %vm1193, %v1805, %v1661
      %v1826 = vsel %vm1193, %v1808, %v1662
      %v1828 = vsel %vm1193, %v1811, %v1663
      %v1830 = vsel %vm1193, %v1814, %v1664
      %v1832 = vsel %vm1210, %v1816, %v1692
      %v1834 = vsel %vm1210, %v1818, %v1693
      %v1836 = vsel %vm1210, %v1820, %v1694
      %v1838 = vsel %vm1210, %v1822, %v1695
      %v1840 = vsel %vm1210, %v1824, %v1696
      %v1842 = vsel %vm1210, %v1826, %v1697
      %v1844 = vsel %vm1210, %v1828, %v1698
      %v1846 = vsel %vm1210, %v1830, %v1699
      %vm1863 = vcmask 1041408
      %v1864 = vrot.slane %v1776, 6
      %v1865 = vrot.slane %v1778, 6
      %v1866 = vrot.slane %v1780, 6
      %v1867 = vrot.slane %v1782, 6
      %v1868 = vrot.slane %v1784, 6
      %v1869 = vrot.slane %v1786, 6
      %v1870 = vrot.slane %v1788, 6
      %v1871 = vrot.slane %v1790, 6
      %v1872 = vrot.slane %v1832, 6
      %v1873 = vsel %vm1863, %v1864, %v1872
      %v1874 = vrot.slane %v1834, 6
      %v1875 = vsel %vm1863, %v1865, %v1874
      %v1876 = vrot.slane %v1836, 6
      %v1877 = vsel %vm1863, %v1866, %v1876
      %v1878 = vrot.slane %v1838, 6
      %v1879 = vsel %vm1863, %v1867, %v1878
      %v1880 = vrot.slane %v1840, 6
      %v1881 = vsel %vm1863, %v1868, %v1880
      %v1882 = vrot.slane %v1842, 6
      %v1883 = vsel %vm1863, %v1869, %v1882
      %v1884 = vrot.slane %v1844, 6
      %v1885 = vsel %vm1863, %v1870, %v1884
      %v1886 = vrot.slane %v1846, 6
      %v1887 = vsel %vm1863, %v1871, %v1886
      %v1888 = vrot.slane %v1727, 6
      %v1889 = vsel %vm1863, %v1872, %v1888
      %v1890 = vrot.slane %v1728, 6
      %v1891 = vsel %vm1863, %v1874, %v1890
      %v1892 = vrot.slane %v1729, 6
      %v1893 = vsel %vm1863, %v1876, %v1892
      %v1894 = vrot.slane %v1730, 6
      %v1895 = vsel %vm1863, %v1878, %v1894
      %v1896 = vrot.slane %v1731, 6
      %v1897 = vsel %vm1863, %v1880, %v1896
      %v1898 = vrot.slane %v1732, 6
      %v1899 = vsel %vm1863, %v1882, %v1898
      %v1900 = vrot.slane %v1733, 6
      %v1901 = vsel %vm1863, %v1884, %v1900
      %v1902 = vrot.slane %v1734, 6
      %v1903 = vsel %vm1863, %v1886, %v1902
      %v1914 = vsel %vm1168, %v1160, %v1864
      %v1918 = vsel %vm1168, %v1161, %v1865
      %v1922 = vsel %vm1168, %v1162, %v1866
      %v1926 = vsel %vm1168, %v1163, %v1867
      %v1930 = vsel %vm1168, %v1164, %v1868
      %v1934 = vsel %vm1168, %v1165, %v1869
      %v1938 = vsel %vm1168, %v1166, %v1870
      %v1942 = vsel %vm1168, %v1167, %v1871
      %v1944 = vld [vmem:[%s3] sm:$0xff]
      %v1945 = vld [vmem:[%s307] sm:$0x1]
      %v1947 = vlaneseq
      %v1948 = vshrl.u32 %v1947, 7
      %v1949 = vsub.s32 0, %v1948
      %v1950 = vrot.slane %v1945, %v1949
      %v1952 = vmul.f32 %v1944, %v1950
      %v1953 = vpack.c.bf16 %v1952, %v1952
      %v1954 = vld [vmem:[%s4] sm:$0xff]
      %1956 = vset.pattern.permute.xlu0 0
      %1957 = vperm.xlu0 %1956, %v1954
      %v1958 = vpop.permute.xlu0 %1957
      %vm1960 = vcmask 588800
      %v1962 = vsel %vm1960, %v1953, 0
      %v1965 = vsel %vm1193, %v1889, 0
      %v1968 = vsel %vm1193, %v1891, 0
      %v1971 = vsel %vm1193, %v1893, 0
      %v1974 = vsel %vm1193, %v1895, 0
      %v1977 = vsel %vm1193, %v1897, 0
      %v1980 = vsel %vm1193, %v1899, 0
      %v1983 = vsel %vm1193, %v1901, 0
      %v1986 = vsel %vm1193, %v1903, 0
      %1988 = vmatprep.subr.bf16.mxu0 %v1215
      %1989 = vmatpush1.bf16.msra.mxu0 %v1212
      %1990 = vmatprep.subr.bf16.mxu0 %v1279
      %1991 = vmatpush1.bf16.msra.mxu0 %v1276
      %1992 = vmatprep.subr.bf16.mxu0 %v1918
      %1993 = vmatpush1.bf16.msra.mxu0 %v1914
      %1994 = vmatprep.subr.bf16.mxu0 %v1875
      %1995 = vmatpush1.bf16.msra.mxu0 %v1873
      %1996 = vmatprep.subr.bf16.mxu0 %v1968
      %1997 = vmatpush1.bf16.msra.mxu0 %v1965
      %1998 = vmatprep.subr.bf16.mxu0 0
      %1999 = vmatpush1.bf16.msra.mxu0 0
      %2000 = vmatprep.subr.bf16.mxu0 0
      %2001 = vmatpush1.bf16.msra.mxu0 0
      %2002 = vmatprep.subr.bf16.mxu0 0
      %2003 = vmatpush1.bf16.msra.mxu0 0
      %2004 = vmatprep.subr.bf16.mxu0 0
      %2005 = vmatpush1.bf16.msra.mxu0 0
      %2006 = vmatprep.subr.bf16.mxu0 0
      %2007 = vmatpush1.bf16.msra.mxu0 0
      %2008 = vmatprep.subr.bf16.mxu0 0
      %2009 = vmatpush1.bf16.msra.mxu0 0
      %2010 = vmatprep.subr.bf16.mxu0 0
      %2011 = vmatpush1.bf16.msra.mxu0 0
      %2012 = vmatprep.subr.bf16.mxu0 0
      %2013 = vmatpush1.bf16.msra.mxu0 0
      %2014 = vmatprep.subr.bf16.mxu0 0
      %2015 = vmatpush1.bf16.msra.mxu0 0
      %2016 = vmatprep.subr.bf16.mxu0 0
      %2017 = vmatpush1.bf16.msra.mxu0 0
      %2018 = vmatprep.subr.bf16.mxu0 0
      %2019 = vmatpush1.bf16.msra.mxu0 0
      %2020 = vmatprep.mubr.bf16.mxu0 0
      %2021 = vmatmul.mubr.bf16.gmra.mrb[0].mxu0 %v1962
      %v2022 = vpop.f32.mrb[0].mxu0
      %v2023 = vadd.f32 %v1958, %v2022
      %v2024 = vpop.f32.mrb[0].mxu0
      %v2025 = vadd.f32 %v1958, %v2024
      %v2026 = vpop.f32.mrb[0].mxu0
      %v2027 = vpop.f32.mrb[0].mxu0
      %2028 = vdwg.mxu0
      %2029 = vmatprep.subr.bf16.mxu0 %v1221
      %2030 = vmatpush1.bf16.msra.mxu0 %v1218
      %2031 = vmatprep.subr.bf16.mxu0 %v1285
      %2032 = vmatpush1.bf16.msra.mxu0 %v1282
      %2033 = vmatprep.subr.bf16.mxu0 %v1926
      %2034 = vmatpush1.bf16.msra.mxu0 %v1922
      %2035 = vmatprep.subr.bf16.mxu0 %v1879
      %2036 = vmatpush1.bf16.msra.mxu0 %v1877
      %2037 = vmatprep.subr.bf16.mxu0 %v1974
      %2038 = vmatpush1.bf16.msra.mxu0 %v1971
      %2039 = vmatprep.subr.bf16.mxu0 0
      %2040 = vmatpush1.bf16.msra.mxu0 0
      %2041 = vmatprep.subr.bf16.mxu0 0
      %2042 = vmatpush1.bf16.msra.mxu0 0
      %2043 = vmatprep.subr.bf16.mxu0 0
      %2044 = vmatpush1.bf16.msra.mxu0 0
      %2045 = vmatprep.subr.bf16.mxu0 0
      %2046 = vmatpush1.bf16.msra.mxu0 0
      %2047 = vmatprep.subr.bf16.mxu0 0
      %2048 = vmatpush1.bf16.msra.mxu0 0
      %2049 = vmatprep.subr.bf16.mxu0 0
      %2050 = vmatpush1.bf16.msra.mxu0 0
      %2051 = vmatprep.subr.bf16.mxu0 0
      %2052 = vmatpush1.bf16.msra.mxu0 0
      %2053 = vmatprep.subr.bf16.mxu0 0
      %2054 = vmatpush1.bf16.msra.mxu0 0
      %2055 = vmatprep.subr.bf16.mxu0 0
      %2056 = vmatpush1.bf16.msra.mxu0 0
      %2057 = vmatprep.subr.bf16.mxu0 0
      %2058 = vmatpush1.bf16.msra.mxu0 0
      %2059 = vmatprep.subr.bf16.mxu0 0
      %2060 = vmatpush1.bf16.msra.mxu0 0
      %2061 = vmatprep.mubr.bf16.mxu0 0
      %2062 = vmatmul.mubr.bf16.gmra.mrb[0].mxu0 %v1962
      %v2063 = vpop.f32.mrb[0].mxu0
      %v2064 = vadd.f32 %v1958, %v2063
      %v2065 = vpop.f32.mrb[0].mxu0
      %v2066 = vadd.f32 %v1958, %v2065
      %v2067 = vpop.f32.mrb[0].mxu0
      %v2068 = vpop.f32.mrb[0].mxu0
      %2069 = vdwg.mxu0
      %2070 = vmatprep.subr.bf16.mxu0 %v1227
      %2071 = vmatpush1.bf16.msra.mxu0 %v1224
      %2072 = vmatprep.subr.bf16.mxu0 %v1291
      %2073 = vmatpush1.bf16.msra.mxu0 %v1288
      %2074 = vmatprep.subr.bf16.mxu0 %v1934
      %2075 = vmatpush1.bf16.msra.mxu0 %v1930
      %2076 = vmatprep.subr.bf16.mxu0 %v1883
      %2077 = vmatpush1.bf16.msra.mxu0 %v1881
      %2078 = vmatprep.subr.bf16.mxu0 %v1980
      %2079 = vmatpush1.bf16.msra.mxu0 %v1977
      %2080 = vmatprep.subr.bf16.mxu0 0
      %2081 = vmatpush1.bf16.msra.mxu0 0
      %2082 = vmatprep.subr.bf16.mxu0 0
      %2083 = vmatpush1.bf16.msra.mxu0 0
      %2084 = vmatprep.subr.bf16.mxu0 0
      %2085 = vmatpush1.bf16.msra.mxu0 0
      %2086 = vmatprep.subr.bf16.mxu0 0
      %2087 = vmatpush1.bf16.msra.mxu0 0
      %2088 = vmatprep.subr.bf16.mxu0 0
      %2089 = vmatpush1.bf16.msra.mxu0 0
      %2090 = vmatprep.subr.bf16.mxu0 0
      %2091 = vmatpush1.bf16.msra.mxu0 0
      %2092 = vmatprep.subr.bf16.mxu0 0
      %2093 = vmatpush1.bf16.msra.mxu0 0
      %2094 = vmatprep.subr.bf16.mxu0 0
      %2095 = vmatpush1.bf16.msra.mxu0 0
      %2096 = vmatprep.subr.bf16.mxu0 0
      %2097 = vmatpush1.bf16.msra.mxu0 0
      %2098 = vmatprep.subr.bf16.mxu0 0
      %2099 = vmatpush1.bf16.msra.mxu0 0
      %2100 = vmatprep.subr.bf16.mxu0 0
      %2101 = vmatpush1.bf16.msra.mxu0 0
      %2102 = vmatprep.mubr.bf16.mxu0 0
      %2103 = vmatmul.mubr.bf16.gmra.mrb[0].mxu0 %v1962
      %v2104 = vpop.f32.mrb[0].mxu0
      %v2105 = vadd.f32 %v1958, %v2104
      %v2106 = vpop.f32.mrb[0].mxu0
      %v2107 = vadd.f32 %v1958, %v2106
      %v2108 = vpop.f32.mrb[0].mxu0
      %v2109 = vpop.f32.mrb[0].mxu0
      %2110 = vdwg.mxu0
      %2111 = vmatprep.subr.bf16.mxu0 %v1233
      %2112 = vmatpush1.bf16.msra.mxu0 %v1230
      %2113 = vmatprep.subr.bf16.mxu0 %v1297
      %2114 = vmatpush1.bf16.msra.mxu0 %v1294
      %2115 = vmatprep.subr.bf16.mxu0 %v1942
      %2116 = vmatpush1.bf16.msra.mxu0 %v1938
      %2117 = vmatprep.subr.bf16.mxu0 %v1887
      %2118 = vmatpush1.bf16.msra.mxu0 %v1885
      %2119 = vmatprep.subr.bf16.mxu0 %v1986
      %2120 = vmatpush1.bf16.msra.mxu0 %v1983
      %2121 = vmatprep.subr.bf16.mxu0 0
      %2122 = vmatpush1.bf16.msra.mxu0 0
      %2123 = vmatprep.subr.bf16.mxu0 0
      %2124 = vmatpush1.bf16.msra.mxu0 0
      %2125 = vmatprep.subr.bf16.mxu0 0
      %2126 = vmatpush1.bf16.msra.mxu0 0
      %2127 = vmatprep.subr.bf16.mxu0 0
      %2128 = vmatpush1.bf16.msra.mxu0 0
      %2129 = vmatprep.subr.bf16.mxu0 0
      %2130 = vmatpush1.bf16.msra.mxu0 0
      %2131 = vmatprep.subr.bf16.mxu0 0
      %2132 = vmatpush1.bf16.msra.mxu0 0
      %2133 = vmatprep.subr.bf16.mxu0 0
      %2134 = vmatpush1.bf16.msra.mxu0 0
      %2135 = vmatprep.subr.bf16.mxu0 0
      %2136 = vmatpush1.bf16.msra.mxu0 0
      %2137 = vmatprep.subr.bf16.mxu0 0
      %2138 = vmatpush1.bf16.msra.mxu0 0
      %2139 = vmatprep.subr.bf16.mxu0 0
      %2140 = vmatpush1.bf16.msra.mxu0 0
      %2141 = vmatprep.subr.bf16.mxu0 0
      %2142 = vmatpush1.bf16.msra.mxu0 0
      %2143 = vmatprep.mubr.bf16.mxu0 0
      %2144 = vmatmul.mubr.bf16.gmra.mrb[0].mxu0 %v1962
      %v2145 = vpop.f32.mrb[0].mxu0
      %v2146 = vadd.f32 %v1958, %v2145
      %v2147 = vpop.f32.mrb[0].mxu0
      %v2148 = vadd.f32 %v1958, %v2147
      %v2149 = vpop.f32.mrb[0].mxu0
      %v2150 = vpop.f32.mrb[0].mxu0
      %2151 = vdwg.mxu0
      %v2152 = vpack.c.bf16 %v2023, %v2023
      %v2153 = vpack.c.bf16 %v2025, %v2025
      %v2154 = vpack.c.bf16 %v2064, %v2064
      %v2155 = vpack.c.bf16 %v2066, %v2066
      %v2156 = vpack.c.bf16 %v2105, %v2105
      %v2157 = vpack.c.bf16 %v2107, %v2107
      %v2158 = vpack.c.bf16 %v2146, %v2146
      %v2159 = vpack.c.bf16 %v2148, %v2148
      %2168 = vrot.lane.b32.xlu0 %v2152, 33
      %v2169 = vpop.permute.xlu0 %2168
      %2170 = vrot.lane.b32.xlu0 %v2153, 33
      %v2171 = vpop.permute.xlu0 %2170
      %2172 = vrot.lane.b32.xlu0 %v2154, 33
      %v2173 = vpop.permute.xlu0 %2172
      %2174 = vrot.lane.b32.xlu0 %v2155, 33
      %v2175 = vpop.permute.xlu0 %2174
      %2176 = vrot.lane.b32.xlu0 %v2156, 33
      %v2177 = vpop.permute.xlu0 %2176
      %2178 = vrot.lane.b32.xlu0 %v2157, 33
      %v2179 = vpop.permute.xlu0 %2178
      %2180 = vrot.lane.b32.xlu0 %v2158, 33
      %v2181 = vpop.permute.xlu0 %2180
      %2182 = vrot.lane.b32.xlu0 %v2159, 33
      %v2183 = vpop.permute.xlu0 %2182
      %v2184 = vsel %vm491, %v2169, %v2171
      %v2185 = vsel %vm491, %v2171, %v2173
      %v2186 = vsel %vm491, %v2173, %v2175
      %v2187 = vsel %vm491, %v2175, %v2177
      %v2188 = vsel %vm491, %v2177, %v2179
      %v2189 = vsel %vm491, %v2179, %v2181
      %v2190 = vsel %vm491, %v2181, %v2183
      %v2199 = vsel %vm506, 0, %v2169
      %v2202 = vsel %vm506, %v2183, 0
      %v2204 = vsel %vm570, %v2199, 0
      %v2205 = vsel %vm571, %v2184, 0
      %v2206 = vsel %vm572, %v2185, 0
      %v2207 = vsel %vm573, %v2186, 0
      %v2208 = vsel %vm574, %v2187, 0
      %v2209 = vsel %vm575, %v2188, 0
      %v2210 = vsel %vm576, %v2189, 0
      %v2211 = vsel %vm577, %v2190, 0
      %v2212 = vsel %vm666, %v2199, 0
      %v2213 = vsel %vm667, %v2184, 0
      %v2214 = vsel %vm668, %v2185, 0
      %v2215 = vsel %vm669, %v2186, 0
      %v2216 = vsel %vm670, %v2187, 0
      %v2217 = vsel %vm671, %v2188, 0
      %v2218 = vsel %vm672, %v2189, 0
      %v2219 = vsel %vm673, %v2190, 0
      %v2220 = vsel %vm674, %v2202, 0
      %v2221 = vsel %vm708, %v2199, 0
      %v2222 = vsel %vm709, %v2184, 0
      %v2223 = vsel %vm710, %v2185, 0
      %v2224 = vsel %vm711, %v2186, 0
      %v2225 = vsel %vm712, %v2187, 0
      %v2226 = vsel %vm713, %v2188, 0
      %v2227 = vsel %vm714, %v2189, 0
      %v2228 = vsel %vm715, %v2190, 0
      %v2229 = vsel %vm716, %v2202, 0
      %v2230 = vsel %vm750, %v2199, 0
      %v2231 = vsel %vm751, %v2184, 0
      %v2232 = vsel %vm752, %v2185, 0
      %v2233 = vsel %vm753, %v2186, 0
      %v2234 = vsel %vm754, %v2187, 0
      %v2235 = vsel %vm755, %v2188, 0
      %v2236 = vsel %vm756, %v2189, 0
      %v2237 = vsel %vm757, %v2190, 0
      %v2238 = vsel %vm758, %v2202, 0
      %v2239 = vsel %vm792, %v2199, 0
      %v2240 = vsel %vm793, %v2184, 0
      %v2241 = vsel %vm794, %v2185, 0
      %v2242 = vsel %vm795, %v2186, 0
      %v2243 = vsel %vm796, %v2187, 0
      %v2244 = vsel %vm797, %v2188, 0
      %v2245 = vsel %vm798, %v2189, 0
      %v2246 = vsel %vm799, %v2190, 0
      %v2247 = vsel %vm800, %v2202, 0
      %v2248 = vsel %vm834, %v2199, 0
      %v2249 = vsel %vm835, %v2184, 0
      %v2250 = vsel %vm836, %v2185, 0
      %v2251 = vsel %vm837, %v2186, 0
      %v2252 = vsel %vm838, %v2187, 0
      %v2253 = vsel %vm839, %v2188, 0
      %v2254 = vsel %vm840, %v2189, 0
      %v2255 = vsel %vm841, %v2190, 0
      %v2256 = vsel %vm842, %v2202, 0
      %v2259 = vrot.slane %v2199, 4
      %v2260 = vrot.slane %v2184, 4
      %v2261 = vrot.slane %v2185, 4
      %v2262 = vrot.slane %v2186, 4
      %v2263 = vrot.slane %v2187, 4
      %v2264 = vrot.slane %v2188, 4
      %v2265 = vrot.slane %v2189, 4
      %v2266 = vrot.slane %v2190, 4
      %v2267 = vrot.slane %v2202, 4
      %2268 = vrot.lane.b32.xlu0 %v2259, 127
      %v2269 = vpop.permute.xlu0 %2268
      %2270 = vrot.lane.b32.xlu0 %v2260, 127
      %v2271 = vpop.permute.xlu0 %2270
      %2272 = vrot.lane.b32.xlu0 %v2261, 127
      %v2273 = vpop.permute.xlu0 %2272
      %2274 = vrot.lane.b32.xlu0 %v2262, 127
      %v2275 = vpop.permute.xlu0 %2274
      %2276 = vrot.lane.b32.xlu0 %v2263, 127
      %v2277 = vpop.permute.xlu0 %2276
      %2278 = vrot.lane.b32.xlu0 %v2264, 127
      %v2279 = vpop.permute.xlu0 %2278
      %2280 = vrot.lane.b32.xlu0 %v2265, 127
      %v2281 = vpop.permute.xlu0 %2280
      %2282 = vrot.lane.b32.xlu0 %v2266, 127
      %v2283 = vpop.permute.xlu0 %2282
      %2284 = vrot.lane.b32.xlu0 %v2267, 127
      %v2285 = vpop.permute.xlu0 %2284
      %v2286 = vsel %vm881, %v2269, %v2271
      %v2287 = vsel %vm881, %v2271, %v2273
      %v2288 = vsel %vm881, %v2273, %v2275
      %v2289 = vsel %vm881, %v2275, %v2277
      %v2290 = vsel %vm881, %v2277, %v2279
      %v2291 = vsel %vm881, %v2279, %v2281
      %v2292 = vsel %vm881, %v2281, %v2283
      %v2293 = vsel %vm881, %v2283, %v2285
      %2303 = vrot.lane.b32.xlu0 %v2212, 126
      %v2304 = vpop.permute.xlu0 %2303
      %2305 = vrot.lane.b32.xlu0 %v2213, 126
      %v2306 = vpop.permute.xlu0 %2305
      %2307 = vrot.lane.b32.xlu0 %v2214, 126
      %v2308 = vpop.permute.xlu0 %2307
      %2309 = vrot.lane.b32.xlu0 %v2215, 126
      %v2310 = vpop.permute.xlu0 %2309
      %2311 = vrot.lane.b32.xlu0 %v2216, 126
      %v2312 = vpop.permute.xlu0 %2311
      %2313 = vrot.lane.b32.xlu0 %v2217, 126
      %v2314 = vpop.permute.xlu0 %2313
      %2315 = vrot.lane.b32.xlu0 %v2218, 126
      %v2316 = vpop.permute.xlu0 %2315
      %2317 = vrot.lane.b32.xlu0 %v2219, 126
      %v2318 = vpop.permute.xlu0 %2317
      %2319 = vrot.lane.b32.xlu0 %v2220, 126
      %v2320 = vpop.permute.xlu0 %2319
      %v2321 = vsel %vm926, %v2304, %v2306
      %v2322 = vsel %vm926, %v2306, %v2308
      %v2323 = vsel %vm926, %v2308, %v2310
      %v2324 = vsel %vm926, %v2310, %v2312
      %v2325 = vsel %vm926, %v2312, %v2314
      %v2326 = vsel %vm926, %v2314, %v2316
      %v2327 = vsel %vm926, %v2316, %v2318
      %v2328 = vsel %vm926, %v2318, %v2320
      %v2338 = vrot.slane %v2221, 4
      %v2339 = vrot.slane %v2222, 4
      %v2340 = vrot.slane %v2223, 4
      %v2341 = vrot.slane %v2224, 4
      %v2342 = vrot.slane %v2225, 4
      %v2343 = vrot.slane %v2226, 4
      %v2344 = vrot.slane %v2227, 4
      %v2345 = vrot.slane %v2228, 4
      %v2346 = vrot.slane %v2229, 4
      %2347 = vrot.lane.b32.xlu0 %v2338, 96
      %v2348 = vpop.permute.xlu0 %2347
      %2349 = vrot.lane.b32.xlu0 %v2339, 96
      %v2350 = vpop.permute.xlu0 %2349
      %2351 = vrot.lane.b32.xlu0 %v2340, 96
      %v2352 = vpop.permute.xlu0 %2351
      %2353 = vrot.lane.b32.xlu0 %v2341, 96
      %v2354 = vpop.permute.xlu0 %2353
      %2355 = vrot.lane.b32.xlu0 %v2342, 96
      %v2356 = vpop.permute.xlu0 %2355
      %2357 = vrot.lane.b32.xlu0 %v2343, 96
      %v2358 = vpop.permute.xlu0 %2357
      %2359 = vrot.lane.b32.xlu0 %v2344, 96
      %v2360 = vpop.permute.xlu0 %2359
      %2361 = vrot.lane.b32.xlu0 %v2345, 96
      %v2362 = vpop.permute.xlu0 %2361
      %2363 = vrot.lane.b32.xlu0 %v2346, 96
      %v2364 = vpop.permute.xlu0 %2363
      %v2365 = vsel %vm971, %v2348, %v2350
      %v2366 = vsel %vm971, %v2350, %v2352
      %v2367 = vsel %vm971, %v2352, %v2354
      %v2368 = vsel %vm971, %v2354, %v2356
      %v2369 = vsel %vm971, %v2356, %v2358
      %v2370 = vsel %vm971, %v2358, %v2360
      %v2371 = vsel %vm971, %v2360, %v2362
      %v2372 = vsel %vm971, %v2362, %v2364
      %2373 = vrot.lane.b32.xlu0 %v2199, 95
      %v2374 = vpop.permute.xlu0 %2373
      %2375 = vrot.lane.b32.xlu0 %v2184, 95
      %v2376 = vpop.permute.xlu0 %2375
      %2377 = vrot.lane.b32.xlu0 %v2185, 95
      %v2378 = vpop.permute.xlu0 %2377
      %2379 = vrot.lane.b32.xlu0 %v2186, 95
      %v2380 = vpop.permute.xlu0 %2379
      %2381 = vrot.lane.b32.xlu0 %v2187, 95
      %v2382 = vpop.permute.xlu0 %2381
      %2383 = vrot.lane.b32.xlu0 %v2188, 95
      %v2384 = vpop.permute.xlu0 %2383
      %2385 = vrot.lane.b32.xlu0 %v2189, 95
      %v2386 = vpop.permute.xlu0 %2385
      %2387 = vrot.lane.b32.xlu0 %v2190, 95
      %v2388 = vpop.permute.xlu0 %2387
      %2389 = vrot.lane.b32.xlu0 %v2202, 95
      %v2390 = vpop.permute.xlu0 %2389
      %v2391 = vsel %vm998, %v2374, %v2376
      %v2392 = vsel %vm998, %v2376, %v2378
      %v2393 = vsel %vm998, %v2378, %v2380
      %v2394 = vsel %vm998, %v2380, %v2382
      %v2395 = vsel %vm998, %v2382, %v2384
      %v2396 = vsel %vm998, %v2384, %v2386
      %v2397 = vsel %vm998, %v2386, %v2388
      %v2398 = vsel %vm998, %v2388, %v2390
      %v2408 = vrot.slane %v2230, 4
      %v2409 = vrot.slane %v2231, 4
      %v2410 = vrot.slane %v2232, 4
      %v2411 = vrot.slane %v2233, 4
      %v2412 = vrot.slane %v2234, 4
      %v2413 = vrot.slane %v2235, 4
      %v2414 = vrot.slane %v2236, 4
      %v2415 = vrot.slane %v2237, 4
      %v2416 = vrot.slane %v2238, 4
      %2417 = vrot.lane.b32.xlu0 %v2408, 94
      %v2418 = vpop.permute.xlu0 %2417
      %2419 = vrot.lane.b32.xlu0 %v2409, 94
      %v2420 = vpop.permute.xlu0 %2419
      %2421 = vrot.lane.b32.xlu0 %v2410, 94
      %v2422 = vpop.permute.xlu0 %2421
      %2423 = vrot.lane.b32.xlu0 %v2411, 94
      %v2424 = vpop.permute.xlu0 %2423
      %2425 = vrot.lane.b32.xlu0 %v2412, 94
      %v2426 = vpop.permute.xlu0 %2425
      %2427 = vrot.lane.b32.xlu0 %v2413, 94
      %v2428 = vpop.permute.xlu0 %2427
      %2429 = vrot.lane.b32.xlu0 %v2414, 94
      %v2430 = vpop.permute.xlu0 %2429
      %2431 = vrot.lane.b32.xlu0 %v2415, 94
      %v2432 = vpop.permute.xlu0 %2431
      %2433 = vrot.lane.b32.xlu0 %v2416, 94
      %v2434 = vpop.permute.xlu0 %2433
      %v2435 = vsel %vm1043, %v2418, %v2420
      %v2436 = vsel %vm1043, %v2420, %v2422
      %v2437 = vsel %vm1043, %v2422, %v2424
      %v2438 = vsel %vm1043, %v2424, %v2426
      %v2439 = vsel %vm1043, %v2426, %v2428
      %v2440 = vsel %vm1043, %v2428, %v2430
      %v2441 = vsel %vm1043, %v2430, %v2432
      %v2442 = vsel %vm1043, %v2432, %v2434
      %2452 = vrot.lane.b32.xlu0 %v2239, 64
      %v2453 = vpop.permute.xlu0 %2452
      %2454 = vrot.lane.b32.xlu0 %v2240, 64
      %v2455 = vpop.permute.xlu0 %2454
      %2456 = vrot.lane.b32.xlu0 %v2241, 64
      %v2457 = vpop.permute.xlu0 %2456
      %2458 = vrot.lane.b32.xlu0 %v2242, 64
      %v2459 = vpop.permute.xlu0 %2458
      %2460 = vrot.lane.b32.xlu0 %v2243, 64
      %v2461 = vpop.permute.xlu0 %2460
      %2462 = vrot.lane.b32.xlu0 %v2244, 64
      %v2463 = vpop.permute.xlu0 %2462
      %2464 = vrot.lane.b32.xlu0 %v2245, 64
      %v2465 = vpop.permute.xlu0 %2464
      %2466 = vrot.lane.b32.xlu0 %v2246, 64
      %v2467 = vpop.permute.xlu0 %2466
      %2468 = vrot.lane.b32.xlu0 %v2247, 64
      %v2469 = vpop.permute.xlu0 %2468
      %v2470 = vsel %vm784, %v2453, %v2455
      %v2471 = vsel %vm784, %v2455, %v2457
      %v2472 = vsel %vm784, %v2457, %v2459
      %v2473 = vsel %vm784, %v2459, %v2461
      %v2474 = vsel %vm784, %v2461, %v2463
      %v2475 = vsel %vm784, %v2463, %v2465
      %v2476 = vsel %vm784, %v2465, %v2467
      %v2477 = vsel %vm784, %v2467, %v2469
      %2478 = vrot.lane.b32.xlu0 %v2259, 63
      %v2479 = vpop.permute.xlu0 %2478
      %2480 = vrot.lane.b32.xlu0 %v2260, 63
      %v2481 = vpop.permute.xlu0 %2480
      %2482 = vrot.lane.b32.xlu0 %v2261, 63
      %v2483 = vpop.permute.xlu0 %2482
      %2484 = vrot.lane.b32.xlu0 %v2262, 63
      %v2485 = vpop.permute.xlu0 %2484
      %2486 = vrot.lane.b32.xlu0 %v2263, 63
      %v2487 = vpop.permute.xlu0 %2486
      %2488 = vrot.lane.b32.xlu0 %v2264, 63
      %v2489 = vpop.permute.xlu0 %2488
      %2490 = vrot.lane.b32.xlu0 %v2265, 63
      %v2491 = vpop.permute.xlu0 %2490
      %2492 = vrot.lane.b32.xlu0 %v2266, 63
      %v2493 = vpop.permute.xlu0 %2492
      %2494 = vrot.lane.b32.xlu0 %v2267, 63
      %v2495 = vpop.permute.xlu0 %2494
      %v2496 = vsel %vm1123, %v2479, %v2481
      %v2497 = vsel %vm1123, %v2481, %v2483
      %v2498 = vsel %vm1123, %v2483, %v2485
      %v2499 = vsel %vm1123, %v2485, %v2487
      %v2500 = vsel %vm1123, %v2487, %v2489
      %v2501 = vsel %vm1123, %v2489, %v2491
      %v2502 = vsel %vm1123, %v2491, %v2493
      %v2503 = vsel %vm1123, %v2493, %v2495
      %2513 = vrot.lane.b32.xlu0 %v2248, 62
      %v2514 = vpop.permute.xlu0 %2513
      %2515 = vrot.lane.b32.xlu0 %v2249, 62
      %v2516 = vpop.permute.xlu0 %2515
      %2517 = vrot.lane.b32.xlu0 %v2250, 62
      %v2518 = vpop.permute.xlu0 %2517
      %2519 = vrot.lane.b32.xlu0 %v2251, 62
      %v2520 = vpop.permute.xlu0 %2519
      %2521 = vrot.lane.b32.xlu0 %v2252, 62
      %v2522 = vpop.permute.xlu0 %2521
      %2523 = vrot.lane.b32.xlu0 %v2253, 62
      %v2524 = vpop.permute.xlu0 %2523
      %2525 = vrot.lane.b32.xlu0 %v2254, 62
      %v2526 = vpop.permute.xlu0 %2525
      %2527 = vrot.lane.b32.xlu0 %v2255, 62
      %v2528 = vpop.permute.xlu0 %2527
      %2529 = vrot.lane.b32.xlu0 %v2256, 62
      %v2530 = vpop.permute.xlu0 %2529
      %v2531 = vsel %vm1159, %v2514, %v2516
      %v2532 = vsel %vm1159, %v2516, %v2518
      %v2533 = vsel %vm1159, %v2518, %v2520
      %v2534 = vsel %vm1159, %v2520, %v2522
      %v2535 = vsel %vm1159, %v2522, %v2524
      %v2536 = vsel %vm1159, %v2524, %v2526
      %v2537 = vsel %vm1159, %v2526, %v2528
      %v2538 = vsel %vm1159, %v2528, %v2530
      %v2541 = vsel %vm1193, %v2204, %v2286
      %v2545 = vsel %vm1193, %v2205, %v2287
      %v2549 = vsel %vm1193, %v2206, %v2288
      %v2553 = vsel %vm1193, %v2207, %v2289
      %v2557 = vsel %vm1193, %v2208, %v2290
      %v2561 = vsel %vm1193, %v2209, %v2291
      %v2565 = vsel %vm1193, %v2210, %v2292
      %v2569 = vsel %vm1193, %v2211, %v2293
      %v2573 = vsel %vm1193, %v2321, %v2365
      %v2577 = vsel %vm1193, %v2322, %v2366
      %v2581 = vsel %vm1193, %v2323, %v2367
      %v2585 = vsel %vm1193, %v2324, %v2368
      %v2589 = vsel %vm1193, %v2325, %v2369
      %v2593 = vsel %vm1193, %v2326, %v2370
      %v2597 = vsel %vm1193, %v2327, %v2371
      %v2601 = vsel %vm1193, %v2328, %v2372
      %v2605 = vsel %vm1193, %v2391, %v2435
      %v2609 = vsel %vm1193, %v2392, %v2436
      %v2613 = vsel %vm1193, %v2393, %v2437
      %v2617 = vsel %vm1193, %v2394, %v2438
      %v2621 = vsel %vm1193, %v2395, %v2439
      %v2625 = vsel %vm1193, %v2396, %v2440
      %v2629 = vsel %vm1193, %v2397, %v2441
      %v2633 = vsel %vm1193, %v2398, %v2442
      %v2637 = vsel %vm1193, %v2470, %v2496
      %v2641 = vsel %vm1193, %v2471, %v2497
      %v2645 = vsel %vm1193, %v2472, %v2498
      %v2649 = vsel %vm1193, %v2473, %v2499
      %v2653 = vsel %vm1193, %v2474, %v2500
      %v2657 = vsel %vm1193, %v2475, %v2501
      %v2661 = vsel %vm1193, %v2476, %v2502
      %v2665 = vsel %vm1193, %v2477, %v2503
      %v2667 = vld [vmem:[%s5] sm:$0x3]
      %v2668 = vld [vmem:[%s6] sm:$0xf]
      %2670 = vset.pattern.permute.xlu0 0
      %2671 = vperm.xlu0 %2670, %v2668
      %v2672 = vpop.permute.xlu0 %2671
      %v2675 = vsel %vm1960, %v2667, 0
      %v2678 = vsel %vm1193, %v2531, 0
      %v2681 = vsel %vm1193, %v2532, 0
      %v2684 = vsel %vm1193, %v2533, 0
      %v2687 = vsel %vm1193, %v2534, 0
      %v2690 = vsel %vm1193, %v2535, 0
      %v2693 = vsel %vm1193, %v2536, 0
      %v2696 = vsel %vm1193, %v2537, 0
      %v2699 = vsel %vm1193, %v2538, 0
      %2701 = vmatprep.subr.bf16.mxu0 %v2545
      %2702 = vmatpush1.bf16.msra.mxu0 %v2541
      %2703 = vmatprep.subr.bf16.mxu0 %v2577
      %2704 = vmatpush1.bf16.msra.mxu0 %v2573
      %2705 = vmatprep.subr.bf16.mxu0 %v2609
      %2706 = vmatpush1.bf16.msra.mxu0 %v2605
      %2707 = vmatprep.subr.bf16.mxu0 %v2641
      %2708 = vmatpush1.bf16.msra.mxu0 %v2637
      %2709 = vmatprep.subr.bf16.mxu0 %v2681
      %2710 = vmatpush1.bf16.msra.mxu0 %v2678
      %2711 = vmatprep.subr.bf16.mxu0 0
      %2712 = vmatpush1.bf16.msra.mxu0 0
      %2713 = vmatprep.subr.bf16.mxu0 0
      %2714 = vmatpush1.bf16.msra.mxu0 0
      %2715 = vmatprep.subr.bf16.mxu0 0
      %2716 = vmatpush1.bf16.msra.mxu0 0
      %2717 = vmatprep.subr.bf16.mxu0 0
      %2718 = vmatpush1.bf16.msra.mxu0 0
      %2719 = vmatprep.subr.bf16.mxu0 0
      %2720 = vmatpush1.bf16.msra.mxu0 0
      %2721 = vmatprep.subr.bf16.mxu0 0
      %2722 = vmatpush1.bf16.msra.mxu0 0
      %2723 = vmatprep.subr.bf16.mxu0 0
      %2724 = vmatpush1.bf16.msra.mxu0 0
      %2725 = vmatprep.subr.bf16.mxu0 0
      %2726 = vmatpush1.bf16.msra.mxu0 0
      %2727 = vmatprep.subr.bf16.mxu0 0
      %2728 = vmatpush1.bf16.msra.mxu0 0
      %2729 = vmatprep.subr.bf16.mxu0 0
      %2730 = vmatpush1.bf16.msra.mxu0 0
      %2731 = vmatprep.subr.bf16.mxu0 0
      %2732 = vmatpush1.bf16.msra.mxu0 0
      %2733 = vmatprep.mubr.bf16.mxu0 0
      %2734 = vmatmul.mubr.bf16.gmra.mrb[0].mxu0 %v2675
      %v2735 = vpop.f32.mrb[0].mxu0
      %v2736 = vadd.f32 %v2672, %v2735
      %v2737 = vpop.f32.mrb[0].mxu0
      %v2738 = vadd.f32 %v2672, %v2737
      %v2739 = vpop.f32.mrb[0].mxu0
      %v2740 = vpop.f32.mrb[0].mxu0
      %2741 = vdwg.mxu0
      %2742 = vmatprep.subr.bf16.mxu0 %v2553
      %2743 = vmatpush1.bf16.msra.mxu0 %v2549
      %2744 = vmatprep.subr.bf16.mxu0 %v2585
      %2745 = vmatpush1.bf16.msra.mxu0 %v2581
      %2746 = vmatprep.subr.bf16.mxu0 %v2617
      %2747 = vmatpush1.bf16.msra.mxu0 %v2613
      %2748 = vmatprep.subr.bf16.mxu0 %v2649
      %2749 = vmatpush1.bf16.msra.mxu0 %v2645
      %2750 = vmatprep.subr.bf16.mxu0 %v2687
      %2751 = vmatpush1.bf16.msra.mxu0 %v2684
      %2752 = vmatprep.subr.bf16.mxu0 0
      %2753 = vmatpush1.bf16.msra.mxu0 0
      %2754 = vmatprep.subr.bf16.mxu0 0
      %2755 = vmatpush1.bf16.msra.mxu0 0
      %2756 = vmatprep.subr.bf16.mxu0 0
      %2757 = vmatpush1.bf16.msra.mxu0 0
      %2758 = vmatprep.subr.bf16.mxu0 0
      %2759 = vmatpush1.bf16.msra.mxu0 0
      %2760 = vmatprep.subr.bf16.mxu0 0
      %2761 = vmatpush1.bf16.msra.mxu0 0
      %2762 = vmatprep.subr.bf16.mxu0 0
      %2763 = vmatpush1.bf16.msra.mxu0 0
      %2764 = vmatprep.subr.bf16.mxu0 0
      %2765 = vmatpush1.bf16.msra.mxu0 0
      %2766 = vmatprep.subr.bf16.mxu0 0
      %2767 = vmatpush1.bf16.msra.mxu0 0
      %2768 = vmatprep.subr.bf16.mxu0 0
      %2769 = vmatpush1.bf16.msra.mxu0 0
      %2770 = vmatprep.subr.bf16.mxu0 0
      %2771 = vmatpush1.bf16.msra.mxu0 0
      %2772 = vmatprep.subr.bf16.mxu0 0
      %2773 = vmatpush1.bf16.msra.mxu0 0
      %2774 = vmatprep.mubr.bf16.mxu0 0
      %2775 = vmatmul.mubr.bf16.gmra.mrb[0].mxu0 %v2675
      %v2776 = vpop.f32.mrb[0].mxu0
      %v2777 = vadd.f32 %v2672, %v2776
      %v2778 = vpop.f32.mrb[0].mxu0
      %v2779 = vadd.f32 %v2672, %v2778
      %v2780 = vpop.f32.mrb[0].mxu0
      %v2781 = vpop.f32.mrb[0].mxu0
      %2782 = vdwg.mxu0
      %2783 = vmatprep.subr.bf16.mxu0 %v2561
      %2784 = vmatpush1.bf16.msra.mxu0 %v2557
      %2785 = vmatprep.subr.bf16.mxu0 %v2593
      %2786 = vmatpush1.bf16.msra.mxu0 %v2589
      %2787 = vmatprep.subr.bf16.mxu0 %v2625
      %2788 = vmatpush1.bf16.msra.mxu0 %v2621
      %2789 = vmatprep.subr.bf16.mxu0 %v2657
      %2790 = vmatpush1.bf16.msra.mxu0 %v2653
      %2791 = vmatprep.subr.bf16.mxu0 %v2693
      %2792 = vmatpush1.bf16.msra.mxu0 %v2690
      %2793 = vmatprep.subr.bf16.mxu0 0
      %2794 = vmatpush1.bf16.msra.mxu0 0
      %2795 = vmatprep.subr.bf16.mxu0 0
      %2796 = vmatpush1.bf16.msra.mxu0 0
      %2797 = vmatprep.subr.bf16.mxu0 0
      %2798 = vmatpush1.bf16.msra.mxu0 0
      %2799 = vmatprep.subr.bf16.mxu0 0
      %2800 = vmatpush1.bf16.msra.mxu0 0
      %2801 = vmatprep.subr.bf16.mxu0 0
      %2802 = vmatpush1.bf16.msra.mxu0 0
      %2803 = vmatprep.subr.bf16.mxu0 0
      %2804 = vmatpush1.bf16.msra.mxu0 0
      %2805 = vmatprep.subr.bf16.mxu0 0
      %2806 = vmatpush1.bf16.msra.mxu0 0
      %2807 = vmatprep.subr.bf16.mxu0 0
      %2808 = vmatpush1.bf16.msra.mxu0 0
      %2809 = vmatprep.subr.bf16.mxu0 0
      %2810 = vmatpush1.bf16.msra.mxu0 0
      %2811 = vmatprep.subr.bf16.mxu0 0
      %2812 = vmatpush1.bf16.msra.mxu0 0
      %2813 = vmatprep.subr.bf16.mxu0 0
      %2814 = vmatpush1.bf16.msra.mxu0 0
      %2815 = vmatprep.mubr.bf16.mxu0 0
      %2816 = vmatmul.mubr.bf16.gmra.mrb[0].mxu0 %v2675
      %v2817 = vpop.f32.mrb[0].mxu0
      %v2818 = vadd.f32 %v2672, %v2817
      %v2819 = vpop.f32.mrb[0].mxu0
      %v2820 = vadd.f32 %v2672, %v2819
      %v2821 = vpop.f32.mrb[0].mxu0
      %v2822 = vpop.f32.mrb[0].mxu0
      %2823 = vdwg.mxu0
      %2824 = vmatprep.subr.bf16.mxu0 %v2569
      %2825 = vmatpush1.bf16.msra.mxu0 %v2565
      %2826 = vmatprep.subr.bf16.mxu0 %v2601
      %2827 = vmatpush1.bf16.msra.mxu0 %v2597
      %2828 = vmatprep.subr.bf16.mxu0 %v2633
      %2829 = vmatpush1.bf16.msra.mxu0 %v2629
      %2830 = vmatprep.subr.bf16.mxu0 %v2665
      %2831 = vmatpush1.bf16.msra.mxu0 %v2661
      %2832 = vmatprep.subr.bf16.mxu0 %v2699
      %2833 = vmatpush1.bf16.msra.mxu0 %v2696
      %2834 = vmatprep.subr.bf16.mxu0 0
      %2835 = vmatpush1.bf16.msra.mxu0 0
      %2836 = vmatprep.subr.bf16.mxu0 0
      %2837 = vmatpush1.bf16.msra.mxu0 0
      %2838 = vmatprep.subr.bf16.mxu0 0
      %2839 = vmatpush1.bf16.msra.mxu0 0
      %2840 = vmatprep.subr.bf16.mxu0 0
      %2841 = vmatpush1.bf16.msra.mxu0 0
      %2842 = vmatprep.subr.bf16.mxu0 0
      %2843 = vmatpush1.bf16.msra.mxu0 0
      %2844 = vmatprep.subr.bf16.mxu0 0
      %2845 = vmatpush1.bf16.msra.mxu0 0
      %2846 = vmatprep.subr.bf16.mxu0 0
      %2847 = vmatpush1.bf16.msra.mxu0 0
      %2848 = vmatprep.subr.bf16.mxu0 0
      %2849 = vmatpush1.bf16.msra.mxu0 0
      %2850 = vmatprep.subr.bf16.mxu0 0
      %2851 = vmatpush1.bf16.msra.mxu0 0
      %2852 = vmatprep.subr.bf16.mxu0 0
      %2853 = vmatpush1.bf16.msra.mxu0 0
      %2854 = vmatprep.subr.bf16.mxu0 0
      %2855 = vmatpush1.bf16.msra.mxu0 0
      %2856 = vmatprep.mubr.bf16.mxu0 0
      %2857 = vmatmul.mubr.bf16.gmra.mrb[0].mxu0 %v2675
      %v2858 = vpop.f32.mrb[0].mxu0
      %v2859 = vadd.f32 %v2672, %v2858
      %v2860 = vpop.f32.mrb[0].mxu0
      %v2861 = vadd.f32 %v2672, %v2860
      %v2862 = vpop.f32.mrb[0].mxu0
      %v2863 = vpop.f32.mrb[0].mxu0
      %2864 = vdwg.mxu0
      %v2873 = vcombine.low %v2736, %v2738
      %v2874 = vcombine.low %v2777, %v2779
      %v2875 = vcombine.low %v2818, %v2820
      %v2876 = vcombine.low %v2859, %v2861
      %2881 = vst [vmem:[%s312] sm:$0xff] %v2873
      %2882 = vst [vmem:[%s312 + $0x8] sm:$0xff] %v2874
      %2883 = vst [vmem:[%s312 + $0x10] sm:$0xff] %v2875
      %2884 = vst [vmem:[%s312 + $0x18] sm:$0xff] %v2876
      %p2885 = scmp.lt.s32.totalorder %s18, 1
      %s2886 = scalar_select %p2885, %s18, 1
      %s2887 = smul.addr %s2886, 8
      %s2888 = smul.addr %s2887, 4
      %s2889 = scalar_lea.vmem %s7, %s2888
      // Predicated region
      $region49: #{decoder_block_forward.1} parent=47 // pred_check
        %p2890 = pneg %p198
      $region50: #{decoder_block_forward.1} parent=47 // pred_check_branch
        %2892 = sbr.rel (%p2890) target = $region52
      $region51: #{decoder_block_forward.1} parent=47 // pred_region
        _
      $region52: #{decoder_block_forward.1} parent=47 // pred_fallthru
        _
    $region48: #{decoder_block_forward.1} parent=5 // pred_fallthru
      _
    %p2893 = scmp.le.s32.totalorder 2, %s13
    // Predicated region
    $region53: #{decoder_block_forward.1} parent=5 // pred_check
      %p2894 = pneg %p2893
    $region54: #{decoder_block_forward.1} parent=5 // pred_check_branch
      %2896 = sbr.rel (%p2894) target = $region56
    $region55: #{decoder_block_forward.1} parent=5 // pred_region
      %s2897 = ssub.s32 %s13, 2
      // Predicated region
      $region57: #{decoder_block_forward.1} parent=55 // pred_check
        %p2898 = pneg %p204
      $region58: #{decoder_block_forward.1} parent=55 // pred_check_branch
        %2900 = sbr.rel (%p2898) target = $region60
      $region59: #{decoder_block_forward.1} parent=55 // pred_region
        %p2901 = scmp.lt.s32.totalorder %s19, 1
        %s2902 = scalar_select %p2901, %s19, 1
        %s2903 = smul.addr %s2902, 8
        %s2904 = smul.addr %s2903, 4
        %s2905 = scalar_lea.vmem %s7, %s2904
      $region60: #{decoder_block_forward.1} parent=55 // pred_fallthru
        _
    $region56: #{decoder_block_forward.1} parent=5 // pred_fallthru
      _
  $region6: #{decoder_block_forward.1} parent=0 // loop_footer
    %s17 = sadd.s32 1, %s13
  $region7: #{decoder_block_forward.1} parent=0 // loop_footer_branch
    %12 = sbr.rel target = $region3
  $region8: #{decoder_block_forward.1} parent=0 // loop_exit
    _

</llo_original>
